<compile_context>
chip_gen: v7x
topology: tpu7x:2x2x1
jax: 0.10.0
libtpu: 0.0.40
codegen_flags: <defaults>
</compile_context>

<pallas_src>
import functools

import numpy as np
import jax
import jax.numpy as jnp
from jax.experimental import pallas as pl
from jax.experimental.pallas import tpu as pltpu


TA = 576.0      # hard-coded 3*3*64 in my_bn1/my_bn2 (kept faithful to the module,
                # even when the actual channel count differs)
N10 = 1023.0    # 2**10 - 1 (my_quantize_activation prec=10)


# --------------------------- host-side constants -----------------------------

def make_tap_masks(H, W):
    """masks[t, s] = 1.0 iff tap t=(ky*3+kx) of the 3x3 'same' conv reads an
    in-bounds pixel for flattened output position s (zero padding expressed as a
    lane mask instead of a physically padded VMEM tile)."""
    hh, ww = np.meshgrid(np.arange(H), np.arange(W), indexing="ij")
    rows = []
    for ky in range(3):
        for kx in range(3):
            oy, ox = ky - 1, kx - 1
            ok = ((hh + oy >= 0) & (hh + oy < H) & (ww + ox >= 0) & (ww + ox < W))
            rows.append(ok.reshape(-1).astype(np.float32))
    return jnp.asarray(np.stack(rows, 0))                      # (9, H*W)


def _pick_images_per_step(N, C, S):
    """Batch Nb images per grid step to amortize per-step overhead while keeping
    >=4 grid steps (>=2 per v7x core) when N allows, and keeping the
    double-buffered in/out blocks + bf16 im2col scratch well inside VMEM
    (budgeted for v7x's 64 MiB part; v5e/v6e have more)."""
    def vmem_bytes(nb):
        blk = nb * C * S * 4                                   # one f32 (nb,C,S) block
        return 2 * 2 * blk + 9 * C * nb * S * 2                # dbl-buffered in+out + im2col
    nb = 1
    while (nb * 2 <= N and N % (nb * 2) == 0 and N // (nb * 2) >= 4
           and vmem_bytes(nb * 2) < (8 << 20)):
        nb *= 2
    return nb


# ----------------------------- Pallas kernels ------------------------------

def _gmax_kernel(x_ref, m_ref):
    # Global abs-max accumulated across the grid into one resident (1,128) block
    # ("arbitrary" axis -> output-resident accumulator): gives the data-dependent
    # quantization range T for the first stage with a single tiny output.
    @pl.when(pl.program_id(0) == 0)
    def _():
        m_ref[...] = jnp.zeros(m_ref.shape, m_ref.dtype)
    m = m_ref[...]
    for nb in range(x_ref.shape[0]):                           # static unroll
        m = jnp.maximum(m, jnp.max(jnp.abs(x_ref[nb])))
    m_ref[...] = m


def pallas_global_absmax(x_ncs, nb):
    N, C, S = x_ncs.shape
    return pl.pallas_call(
        _gmax_kernel,
        out_shape=jax.ShapeDtypeStruct((1, 128), jnp.float32),
        grid=(N // nb,),
        in_specs=[pl.BlockSpec((nb, C, S), lambda i: (i, 0, 0))],
        out_specs=pl.BlockSpec((1, 128), lambda i: (0, 0)),
        compiler_params=pltpu.CompilerParams(dimension_semantics=("arbitrary",)),
    )(x_ncs)


def _stage_kernel(t_ref, x_ref, w_ref, m1_ref, m2_ref, b2_ref, mask_ref,
                  o_ref, bmax_ref, col_ref, *, H, W, Nb):
    """Fused: quantize -> binary 3x3 conv as ONE (C,9C)@(9C,Nb*S) MXU matmul over
    an in-VMEM im2col (built with XLU lane rolls + boundary masks) -> quantized
    folded BN -> residual add -> hardtanh -> lane-dense stores + fused abs-max.
    Channels stay on sublanes / spatial on lanes throughout: no transposes and
    the whole epilogue runs on lane-dense (C, Nb*S) vregs."""
    C = x_ref.shape[1]
    S = H * W

    T = t_ref[0, 0]
    qs = 7.0 / T                                               # one scalar divide per step

    # ---- build the quantized im2col (9C, Nb*S) in VMEM ------------------------
    for nb in range(Nb):                                       # static unroll
        xi = x_ref[nb]                                         # (C, S) f32, lane-dense
        k = jnp.round(jnp.clip(xi, -T, T) * qs)                # my_quantize_conv*7: ints in [-7,7]
        for t in range(9):
            ky, kx = divmod(t, 3)
            d = (ky - 1) * W + (kx - 1)                        # flattened tap offset
            if d == 0:
                tap = k                                        # center tap: no shift, no mask
            else:
                # shifted[:, s] = k[:, (s + d) % S]; wrapped lanes are all masked out
                shifted = pltpu.roll(k, shift=(-d) % S, axis=1)
                tap = shifted * mask_ref[t:t + 1, :]           # zero the padded border
            col_ref[t * C:(t + 1) * C, nb * S:(nb + 1) * S] = tap.astype(jnp.bfloat16)

    # ---- IRConv2d 3x3 as a single MXU matmul on the exact integer lattice -----
    acc = jnp.dot(w_ref[...], col_ref[...],
                  preferred_element_type=jnp.float32)          # (C, Nb*S), exact ints

    # ---- my_bnX (eval, folded & quantized) + residual + hardtanh --------------
    #   conv = acc * (sw/7);  actq = round(conv/TA*N10) * TA/N10
    #   out  = actq*bnw_q + bnb_q + k/7      (shortcut adds the *quantized* x)
    # with m1 = sw/7 * N10/TA,  m2 = TA/N10 * bnw_q,  b2 = bnb_q pre-folded.
    k_all = col_ref[4 * C:5 * C, :].astype(jnp.float32)        # center taps == quantized input (exact in bf16)
    pre = jnp.round(acc * m1_ref[...])
    out = pre * m2_ref[...] + b2_ref[...] + k_all * (1.0 / 7.0)
    out = jnp.clip(out, -1.0, 1.0)                             # F.hardtanh

    for nb in range(Nb):
        o_ref[nb] = out[:, nb * S:(nb + 1) * S]                # lane-aligned stores
    # fused abs-max: the next stage's quantization range needs no extra HBM pass
    bmax_ref[...] = jnp.zeros(bmax_ref.shape, bmax_ref.dtype) + jnp.max(jnp.abs(out))


def pallas_stage(x_ncs, T, w_mat, m1, m2, b2, masks, H, W, nb):
    N, C, S = x_ncs.shape
    assert N % nb == 0
    gn = N // nb
    kern = functools.partial(_stage_kernel, H=H, W=W, Nb=nb)
    out, bmax = pl.pallas_call(
        kern,
        out_shape=(jax.ShapeDtypeStruct((N, C, S), jnp.float32),
                   jax.ShapeDtypeStruct((gn, 1, 128), jnp.float32)),
        grid=(gn,),
        in_specs=[
            pl.BlockSpec(memory_space=pltpu.MemorySpace.SMEM),   # T: (1,1) scalar
            pl.BlockSpec((nb, C, S), lambda i: (i, 0, 0)),       # activations (NCHW flat)
            pl.BlockSpec((C, 9 * C), lambda i: (0, 0)),          # binary weight signs (C, 9C)
            pl.BlockSpec((C, 1), lambda i: (0, 0)),              # m1 = sw/7 * N10/TA
            pl.BlockSpec((C, 1), lambda i: (0, 0)),              # m2 = TA/N10 * bnw_q
            pl.BlockSpec((C, 1), lambda i: (0, 0)),              # b2 = bnb_q
            pl.BlockSpec((9, S), lambda i: (0, 0)),              # conv boundary masks
        ],
        out_specs=(pl.BlockSpec((nb, C, S), lambda i: (i, 0, 0)),
                   pl.BlockSpec((1, 1, 128), lambda i: (i, 0, 0))),
        scratch_shapes=[pltpu.VMEM((9 * C, nb * S), jnp.bfloat16)],   # im2col
        compiler_params=pltpu.CompilerParams(dimension_semantics=("parallel",)),
    )(T, x_ncs, w_mat, m1, m2, b2, masks)
    return out, bmax


# -------------------- one-time (eval) parameter preprocessing ---------------

def _binarize_conv(w_oihw):
    """IRConv2d weight path, factored into a +/-1 sign matrix (laid out (C_out, 9*C_in)
    so the conv is a single W @ im2col matmul with no in-kernel transposes) and a
    per-out-channel power-of-two scale.
    # TODO(synk): ir_1w8a / binaryfunction sources are not provided; the standard
    # IR-Net weight binarization (sign of std-normalized w * 2^round(log2(mean|w|)))
    # is assumed."""
    co = w_oihw.shape[0]
    wf = w_oihw.reshape(co, -1)
    bw = wf - jnp.mean(wf, axis=1, keepdims=True)
    bw = bw / jnp.std(bw, axis=1, keepdims=True, ddof=1)        # torch .std() is unbiased
    sw = 2.0 ** jnp.round(jnp.log2(jnp.mean(jnp.abs(bw), axis=1, keepdims=True)))
    sign_oihw = jnp.sign(bw).reshape(w_oihw.shape)              # (co, ci, 3, 3)
    # (co,ci,ky,kx) -> (co,ky,kx,ci) -> (co, 9*ci): col index = (ky*3+kx)*C + ci,
    # matching the im2col row ordering built in the kernel.
    sign_mat = jnp.transpose(sign_oihw, (0, 2, 3, 1)).reshape(co, -1)
    return sign_mat.astype(jnp.bfloat16), sw.reshape(-1)


def _bn_folded_quantized(gamma, beta, rmean, rvar, eps=1e-5):
    """my_bnX in eval mode: BN folded to per-channel (scale, bias), both quantized.
    The reference module builds a diagonal CxCx1x1 conv; for a diagonal matrix the
    quantization range T equals max|scale|, so per-channel math is exact."""
    std = jnp.sqrt(rvar + eps)
    w = gamma / std
    b = beta - w * rmean
    Tw = jnp.clip(jnp.max(jnp.abs(w)), 1e-10, 255.0)
    wq = jnp.round(jnp.clip(w, -Tw, Tw) / Tw * 7.0) / 7.0 * Tw            # prec=3
    Tb = jnp.clip(jnp.max(jnp.abs(b)), 1e-10, 255.0)
    bq = jnp.round(jnp.clip(b, -Tb, Tb) / Tb * 4095.0) / 4095.0 * Tb      # prec=12
    return wq, bq


def prepare_block(params):
    """Hoisted out of the per-call jit: binarize weights, fold+quantize BN, and
    pre-fold every static scalar so the kernel epilogue is mul/round/mul-add only."""
    prep = {}
    for s in ("1", "2"):
        sign_mat, sw = _binarize_conv(params[f"conv{s}_w"])
        bnw, bnb = _bn_folded_quantized(params[f"bn{s}_gamma"], params[f"bn{s}_beta"],
                                        params[f"bn{s}_rmean"], params[f"bn{s}_rvar"])
        C = sign_mat.shape[0]
        prep[f"w{s}"] = sign_mat                                               # (C, 9C) bf16
        prep[f"m1_{s}"] = (sw / 7.0 * (N10 / TA)).reshape(C, 1).astype(jnp.float32)
        prep[f"m2_{s}"] = ((TA / N10) * bnw).reshape(C, 1).astype(jnp.float32)
        prep[f"b2_{s}"] = bnb.reshape(C, 1).astype(jnp.float32)
    return prep


# ------------------------------ forward pass --------------------------------

@jax.jit
def basic_block_forward(x_nchw, prep):
    # stride=1, in_planes==planes -> identity shortcut; the module's shortcut(x)
    # adds the *quantized* x (k/7), which the stage kernel reuses from its im2col.
    N, C, H, W = x_nchw.shape
    S = H * W
    x = x_nchw.reshape(N, C, S).astype(jnp.float32)       # NCHW kept, free reshape
    nb = _pick_images_per_step(N, C, S)                   # static under jit
    masks = make_tap_masks(H, W)                          # trace-time constant

    # stage 1: tiled global abs-max -> T1; fused quantize/conv1/bn1/+res/hardtanh
    T1 = jnp.clip(jnp.max(pallas_global_absmax(x, nb)), 1e-10, 255.0).reshape(1, 1)
    out1, bmax1 = pallas_stage(x, T1, prep["w1"], prep["m1_1"], prep["m2_1"],
                               prep["b2_1"], masks, H, W, nb)

    # stage 2: T2 comes free from stage-1's fused per-step max (no extra HBM pass)
    T2 = jnp.clip(jnp.max(bmax1), 1e-10, 255.0).reshape(1, 1)
    out2, _ = pallas_stage(out1, T2, prep["w2"], prep["m1_2"], prep["m2_2"],
                           prep["b2_2"], masks, H, W, nb)

    return out2.reshape(N, C, H, W)


# ---------------------- pure-JAX reference (for checking) -------------------

def reference_forward(x_nchw, prep):
    """Independent path: NHWC + lax.conv on the same integer lattice / folded
    constants (algebraically identical to the module's eval-mode math:
    conv(k/7, sign*sw) == (sw/7)*conv(k, sign), etc.), so the comparison against
    the Pallas kernels is numerically stable and tight."""
    x = jnp.transpose(x_nchw, (0, 2, 3, 1)).astype(jnp.float32)   # NHWC
    C = x.shape[-1]

    def quant_k(a):                          # my_quantize_conv(., 3), times 7
        T = jnp.clip(jnp.max(jnp.abs(a)), 1e-10, 255.0)
        return jnp.round(jnp.clip(a, -T, T) * (7.0 / T))

    def conv_s(k, w_mat):                    # integer-lattice 3x3 'same' conv
        w_hwio = jnp.transpose(w_mat.astype(jnp.float32).reshape(C, 3, 3, C),
                               (1, 2, 3, 0))
        return jax.lax.conv_general_dilated(
            k, w_hwio, window_strides=(1, 1), padding=((1, 1), (1, 1)),
            dimension_numbers=("NHWC", "HWIO", "NHWC"))

    def stage(a, w_mat, m1, m2, b2):
        k = quant_k(a)
        s = conv_s(k, w_mat)
        out = jnp.round(s * m1.reshape(-1)) * m2.reshape(-1) + b2.reshape(-1) \
            + k * (1.0 / 7.0)
        return jnp.clip(out, -1.0, 1.0)

    o1 = stage(x, prep["w1"], prep["m1_1"], prep["m2_1"], prep["b2_1"])
    o2 = stage(o1, prep["w2"], prep["m1_2"], prep["m2_2"], prep["b2_2"])
    return jnp.transpose(o2, (0, 3, 1, 2))


# --------------------------------- main --------------------------------------

if __name__ == "__main__":
    key = jax.random.PRNGKey(0)
    ks = jax.random.split(key, 11)
    N, C, H, W = 2, 16, 16, 16     # in_planes == planes, stride=1 (identity shortcut)
    x = jax.random.normal(ks[0], (N, C, H, W), jnp.float32)

    params = {
        "conv1_w": 0.1 * jax.random.normal(ks[1], (C, C, 3, 3), jnp.float32),
        "conv2_w": 0.1 * jax.random.normal(ks[2], (C, C, 3, 3), jnp.float32),
        "bn1_gamma": 1.0 + 0.1 * jax.random.normal(ks[3], (C,), jnp.float32),
        "bn1_beta": 0.1 * jax.random.normal(ks[4], (C,), jnp.float32),
        "bn1_rmean": 0.1 * jax.random.normal(ks[5], (C,), jnp.float32),
        "bn1_rvar": 1.0 + 0.1 * jnp.abs(jax.random.normal(ks[6], (C,), jnp.float32)),
        "bn2_gamma": 1.0 + 0.1 * jax.random.normal(ks[7], (C,), jnp.float32),
        "bn2_beta": 0.1 * jax.random.normal(ks[8], (C,), jnp.float32),
        "bn2_rmean": 0.1 * jax.random.normal(ks[9], (C,), jnp.float32),
        "bn2_rvar": 1.0 + 0.1 * jnp.abs(jax.random.normal(ks[10], (C,), jnp.float32)),
    }

    prep = jax.tree_util.tree_map(jax.block_until_ready, prepare_block(params))

    out = jax.block_until_ready(basic_block_forward(x, prep))
    ref = jax.block_until_ready(reference_forward(x, prep))

    assert out.shape == (N, C, H, W) and out.dtype == jnp.float32
    diff = jnp.abs(out - ref)
    # Both paths accumulate the binary conv exactly on the integer lattice
    # (|sums| << 2^24), so kernel and reference should agree to fp ulps.
    assert float(jnp.max(diff)) < 1e-3, float(jnp.max(diff))
    print("KERNEL_OK")
</pallas_src>

<mosaic_0001>
module attributes {stable_mosaic.version = 11 : i64} {
  func.func @_gmax_kernel(%arg0: i32, %arg1: memref<1x16x256xf32, #tpu.memory_space<vmem>>, %arg2: memref<1x128xf32, #tpu.memory_space<vmem>>) attributes {dimension_semantics = [#tpu.dimension_semantics<arbitrary>], iteration_bounds = array<i64: 2>, scalar_prefetch = 0 : i64, scratch_operands = 0 : i64, tpu.core_type = #tpu.core_type<tc>, window_params = [{transform_indices = @transform_0, window_bounds = array<i64: 1, 16, 256>}, {pipeline_mode = #tpu.pipeline_mode<synchronous>, transform_indices = @transform_1, window_bounds = array<i64: 1, 128>}]} {
    %c0_i32 = arith.constant 0 : i32
    %0 = arith.cmpi eq, %arg0, %c0_i32 : i32
    %1 = arith.extui %0 : i1 to i32
    %c0_i32_0 = arith.constant 0 : i32
    %2 = arith.cmpi ne, %1, %c0_i32_0 : i32
    scf.if %2 {
      %cst_7 = arith.constant 0.000000e+00 : f32
      %14 = vector.broadcast %cst_7 : f32 to vector<1x128xf32>
      %c0_8 = arith.constant 0 : index
      %c0_9 = arith.constant 0 : index
      %15 = vector.load %arg2[%c0_8, %c0_9] : memref<1x128xf32, #tpu.memory_space<vmem>>, vector<1x128xf32>
      tpu.vector_store %arg2[%c0_8, %c0_9], %14 {strides = array<i32>} : memref<1x128xf32, #tpu.memory_space<vmem>>, vector<1x128xf32>,
    } else {
    }
    %c0 = arith.constant 0 : index
    %c0_1 = arith.constant 0 : index
    %3 = vector.load %arg2[%c0, %c0_1] : memref<1x128xf32, #tpu.memory_space<vmem>>, vector<1x128xf32>
    %c0_2 = arith.constant 0 : index
    %c0_3 = arith.constant 0 : index
    %c0_4 = arith.constant 0 : index
    %4 = vector.load %arg1[%c0_2, %c0_3, %c0_4] : memref<1x16x256xf32, #tpu.memory_space<vmem>>, vector<1x16x256xf32>
    %5 = vector.shape_cast %4 : vector<1x16x256xf32> to vector<16x256xf32>
    %6 = math.absf %5 : vector<16x256xf32>
    %7 = vector.shape_cast %6 : vector<16x256xf32> to vector<1x16x256xf32>
    %cst = arith.constant dense<0xFF800000> : vector<1xf32>
    %8 = vector.multi_reduction <maximumf>, %7, %cst [1, 2] : vector<1x16x256xf32> to vector<1xf32>
    %9 = vector.shape_cast %8 : vector<1xf32> to vector<1x1x1xf32>
    %10 = vector.extract %9[0, 0, 0] : f32 from vector<1x1x1xf32>
    %11 = vector.broadcast %10 : f32 to vector<1x128xf32>
    %12 = arith.maximumf %3, %11 : vector<1x128xf32>
    %c0_5 = arith.constant 0 : index
    %c0_6 = arith.constant 0 : index
    %13 = vector.load %arg2[%c0_5, %c0_6] : memref<1x128xf32, #tpu.memory_space<vmem>>, vector<1x128xf32>
    tpu.vector_store %arg2[%c0_5, %c0_6], %12 {strides = array<i32>} : memref<1x128xf32, #tpu.memory_space<vmem>>, vector<1x128xf32>,
    return
  }
  func.func @transform_0(%arg0: i32) -> (i32, i32, i32) {
    %c0_i32 = arith.constant 0 : i32
    %c0_i32_0 = arith.constant 0 : i32
    %c0_i32_1 = arith.constant 0 : i32
    return %arg0, %c0_i32, %c0_i32_0 : i32, i32, i32
  }
  func.func @transform_1(%arg0: i32) -> (i32, i32) {
    %c0_i32 = arith.constant 0 : i32
    %c0_i32_0 = arith.constant 0 : i32
    %c0_i32_1 = arith.constant 0 : i32
    return %c0_i32, %c0_i32_0 : i32, i32
  }
}

module attributes {stable_mosaic.version = 11 : i64} {
  func.func @_stage_kernel(%arg0: i32, %arg1: memref<1x1xf32, #tpu.memory_space<smem>>, %arg2: memref<1x16x256xf32, #tpu.memory_space<vmem>>, %arg3: memref<16x144xbf16, #tpu.memory_space<vmem>>, %arg4: memref<16x1xf32, #tpu.memory_space<vmem>>, %arg5: memref<16x1xf32, #tpu.memory_space<vmem>>, %arg6: memref<16x1xf32, #tpu.memory_space<vmem>>, %arg7: memref<9x256xf32, #tpu.memory_space<vmem>>, %arg8: memref<1x16x256xf32, #tpu.memory_space<vmem>>, %arg9: memref<1x1x128xf32, #tpu.memory_space<vmem>>, %arg10: memref<144x256xbf16, #tpu.memory_space<vmem>>) attributes {dimension_semantics = [#tpu.dimension_semantics<parallel>], iteration_bounds = array<i64: 2>, scalar_prefetch = 0 : i64, scratch_operands = 1 : i64, tpu.core_type = #tpu.core_type<tc>, window_params = [{transform_indices = @transform_0, window_bounds = array<i64: 1, 1>}, {transform_indices = @transform_1, window_bounds = array<i64: 1, 16, 256>}, {pipeline_mode = #tpu.pipeline_mode<synchronous>, transform_indices = @transform_2, window_bounds = array<i64: 16, 144>}, {pipeline_mode = #tpu.pipeline_mode<synchronous>, transform_indices = @transform_3, window_bounds = array<i64: 16, 1>}, {pipeline_mode = #tpu.pipeline_mode<synchronous>, transform_indices = @transform_4, window_bounds = array<i64: 16, 1>}, {pipeline_mode = #tpu.pipeline_mode<synchronous>, transform_indices = @transform_5, window_bounds = array<i64: 16, 1>}, {pipeline_mode = #tpu.pipeline_mode<synchronous>, transform_indices = @transform_6, window_bounds = array<i64: 9, 256>}, {transform_indices = @transform_7, window_bounds = array<i64: 1, 16, 256>}, {transform_indices = @transform_8, window_bounds = array<i64: 1, 1, 128>}]} {
    %c0 = arith.constant 0 : index
    %c0_0 = arith.constant 0 : index
    %0 = memref.load %arg1[%c0, %c0_0] : memref<1x1xf32, #tpu.memory_space<smem>>
    %cst = arith.constant 7.000000e+00 : f32
    %1 = arith.divf %cst, %0 : f32
    %c0_1 = arith.constant 0 : index
    %c0_2 = arith.constant 0 : index
    %c0_3 = arith.constant 0 : index
    %2 = vector.load %arg2[%c0_1, %c0_2, %c0_3] : memref<1x16x256xf32, #tpu.memory_space<vmem>>, vector<1x16x256xf32>
    %3 = vector.shape_cast %2 : vector<1x16x256xf32> to vector<16x256xf32>
    %cst_4 = arith.constant 0.000000e+00 : f32
    %4 = arith.subf %cst_4, %0 : f32
    %5 = vector.broadcast %4 : f32 to vector<16x256xf32>
    %6 = arith.maximumf %5, %3 : vector<16x256xf32>
    %7 = vector.broadcast %0 : f32 to vector<16x256xf32>
    %8 = arith.minimumf %7, %6 : vector<16x256xf32>
    %9 = vector.broadcast %1 : f32 to vector<16x256xf32>
    %10 = arith.mulf %8, %9 : vector<16x256xf32>
    %11 = math.roundeven %10 : vector<16x256xf32>
    %c17_i32 = arith.constant 17 : i32
    %12 = tpu.dynamic_rotate %11 by %c17_i32 dim 1 : vector<16x256xf32>, i32 -> vector<16x256xf32>
    %c0_5 = arith.constant 0 : index
    %c0_6 = arith.constant 0 : index
    %13 = vector.load %arg7[%c0_5, %c0_6] : memref<9x256xf32, #tpu.memory_space<vmem>>, vector<1x256xf32>
    %14 = vector.broadcast %13 : vector<1x256xf32> to vector<16x256xf32>
    %15 = arith.mulf %12, %14 : vector<16x256xf32>
    %16 = arith.truncf %15 : vector<16x256xf32> to vector<16x256xbf16>
    %c0_7 = arith.constant 0 : index
    %c0_8 = arith.constant 0 : index
    %17 = vector.load %arg10[%c0_7, %c0_8] : memref<144x256xbf16, #tpu.memory_space<vmem>>, vector<16x256xbf16>
    tpu.vector_store %arg10[%c0_7, %c0_8], %16 {strides = array<i32>} : memref<144x256xbf16, #tpu.memory_space<vmem>>, vector<16x256xbf16>,
    %c16_i32 = arith.constant 16 : i32
    %18 = tpu.dynamic_rotate %11 by %c16_i32 dim 1 : vector<16x256xf32>, i32 -> vector<16x256xf32>
    %c1 = arith.constant 1 : index
    %c0_9 = arith.constant 0 : index
    %19 = vector.load %arg7[%c1, %c0_9] : memref<9x256xf32, #tpu.memory_space<vmem>>, vector<1x256xf32>
    %20 = vector.broadcast %19 : vector<1x256xf32> to vector<16x256xf32>
    %21 = arith.mulf %18, %20 : vector<16x256xf32>
    %22 = arith.truncf %21 : vector<16x256xf32> to vector<16x256xbf16>
    %c16 = arith.constant 16 : index
    %c0_10 = arith.constant 0 : index
    %23 = vector.load %arg10[%c16, %c0_10] : memref<144x256xbf16, #tpu.memory_space<vmem>>, vector<16x256xbf16>
    tpu.vector_store %arg10[%c16, %c0_10], %22 {strides = array<i32>} : memref<144x256xbf16, #tpu.memory_space<vmem>>, vector<16x256xbf16>,
    %c15_i32 = arith.constant 15 : i32
    %24 = tpu.dynamic_rotate %11 by %c15_i32 dim 1 : vector<16x256xf32>, i32 -> vector<16x256xf32>
    %c2 = arith.constant 2 : index
    %c0_11 = arith.constant 0 : index
    %25 = vector.load %arg7[%c2, %c0_11] : memref<9x256xf32, #tpu.memory_space<vmem>>, vector<1x256xf32>
    %26 = vector.broadcast %25 : vector<1x256xf32> to vector<16x256xf32>
    %27 = arith.mulf %24, %26 : vector<16x256xf32>
    %28 = arith.truncf %27 : vector<16x256xf32> to vector<16x256xbf16>
    %c32 = arith.constant 32 : index
    %c0_12 = arith.constant 0 : index
    %29 = vector.load %arg10[%c32, %c0_12] : memref<144x256xbf16, #tpu.memory_space<vmem>>, vector<16x256xbf16>
    tpu.vector_store %arg10[%c32, %c0_12], %28 {strides = array<i32>} : memref<144x256xbf16, #tpu.memory_space<vmem>>, vector<16x256xbf16>,
    %c1_i32 = arith.constant 1 : i32
    %30 = tpu.dynamic_rotate %11 by %c1_i32 dim 1 : vector<16x256xf32>, i32 -> vector<16x256xf32>
    %c3 = arith.constant 3 : index
    %c0_13 = arith.constant 0 : index
    %31 = vector.load %arg7[%c3, %c0_13] : memref<9x256xf32, #tpu.memory_space<vmem>>, vector<1x256xf32>
    %32 = vector.broadcast %31 : vector<1x256xf32> to vector<16x256xf32>
    %33 = arith.mulf %30, %32 : vector<16x256xf32>
    %34 = arith.truncf %33 : vector<16x256xf32> to vector<16x256xbf16>
    %c48 = arith.constant 48 : index
    %c0_14 = arith.constant 0 : index
    %35 = vector.load %arg10[%c48, %c0_14] : memref<144x256xbf16, #tpu.memory_space<vmem>>, vector<16x256xbf16>
    tpu.vector_store %arg10[%c48, %c0_14], %34 {strides = array<i32>} : memref<144x256xbf16, #tpu.memory_space<vmem>>, vector<16x256xbf16>,
    %36 = arith.truncf %11 : vector<16x256xf32> to vector<16x256xbf16>
    %c64 = arith.constant 64 : index
    %c0_15 = arith.constant 0 : index
    %37 = vector.load %arg10[%c64, %c0_15] : memref<144x256xbf16, #tpu.memory_space<vmem>>, vector<16x256xbf16>
    tpu.vector_store %arg10[%c64, %c0_15], %36 {strides = array<i32>} : memref<144x256xbf16, #tpu.memory_space<vmem>>, vector<16x256xbf16>,
    %c255_i32 = arith.constant 255 : i32
    %38 = tpu.dynamic_rotate %11 by %c255_i32 dim 1 : vector<16x256xf32>, i32 -> vector<16x256xf32>
    %c5 = arith.constant 5 : index
    %c0_16 = arith.constant 0 : index
    %39 = vector.load %arg7[%c5, %c0_16] : memref<9x256xf32, #tpu.memory_space<vmem>>, vector<1x256xf32>
    %40 = vector.broadcast %39 : vector<1x256xf32> to vector<16x256xf32>
    %41 = arith.mulf %38, %40 : vector<16x256xf32>
    %42 = arith.truncf %41 : vector<16x256xf32> to vector<16x256xbf16>
    %c80 = arith.constant 80 : index
    %c0_17 = arith.constant 0 : index
    %43 = vector.load %arg10[%c80, %c0_17] : memref<144x256xbf16, #tpu.memory_space<vmem>>, vector<16x256xbf16>
    tpu.vector_store %arg10[%c80, %c0_17], %42 {strides = array<i32>} : memref<144x256xbf16, #tpu.memory_space<vmem>>, vector<16x256xbf16>,
    %c241_i32 = arith.constant 241 : i32
    %44 = tpu.dynamic_rotate %11 by %c241_i32 dim 1 : vector<16x256xf32>, i32 -> vector<16x256xf32>
    %c6 = arith.constant 6 : index
    %c0_18 = arith.constant 0 : index
    %45 = vector.load %arg7[%c6, %c0_18] : memref<9x256xf32, #tpu.memory_space<vmem>>, vector<1x256xf32>
    %46 = vector.broadcast %45 : vector<1x256xf32> to vector<16x256xf32>
    %47 = arith.mulf %44, %46 : vector<16x256xf32>
    %48 = arith.truncf %47 : vector<16x256xf32> to vector<16x256xbf16>
    %c96 = arith.constant 96 : index
    %c0_19 = arith.constant 0 : index
    %49 = vector.load %arg10[%c96, %c0_19] : memref<144x256xbf16, #tpu.memory_space<vmem>>, vector<16x256xbf16>
    tpu.vector_store %arg10[%c96, %c0_19], %48 {strides = array<i32>} : memref<144x256xbf16, #tpu.memory_space<vmem>>, vector<16x256xbf16>,
    %c240_i32 = arith.constant 240 : i32
    %50 = tpu.dynamic_rotate %11 by %c240_i32 dim 1 : vector<16x256xf32>, i32 -> vector<16x256xf32>
    %c7 = arith.constant 7 : index
    %c0_20 = arith.constant 0 : index
    %51 = vector.load %arg7[%c7, %c0_20] : memref<9x256xf32, #tpu.memory_space<vmem>>, vector<1x256xf32>
    %52 = vector.broadcast %51 : vector<1x256xf32> to vector<16x256xf32>
    %53 = arith.mulf %50, %52 : vector<16x256xf32>
    %54 = arith.truncf %53 : vector<16x256xf32> to vector<16x256xbf16>
    %c112 = arith.constant 112 : index
    %c0_21 = arith.constant 0 : index
    %55 = vector.load %arg10[%c112, %c0_21] : memref<144x256xbf16, #tpu.memory_space<vmem>>, vector<16x256xbf16>
    tpu.vector_store %arg10[%c112, %c0_21], %54 {strides = array<i32>} : memref<144x256xbf16, #tpu.memory_space<vmem>>, vector<16x256xbf16>,
    %c239_i32 = arith.constant 239 : i32
    %56 = tpu.dynamic_rotate %11 by %c239_i32 dim 1 : vector<16x256xf32>, i32 -> vector<16x256xf32>
    %c8 = arith.constant 8 : index
    %c0_22 = arith.constant 0 : index
    %57 = vector.load %arg7[%c8, %c0_22] : memref<9x256xf32, #tpu.memory_space<vmem>>, vector<1x256xf32>
    %58 = vector.broadcast %57 : vector<1x256xf32> to vector<16x256xf32>
    %59 = arith.mulf %56, %58 : vector<16x256xf32>
    %60 = arith.truncf %59 : vector<16x256xf32> to vector<16x256xbf16>
    %c128 = arith.constant 128 : index
    %c0_23 = arith.constant 0 : index
    %61 = vector.load %arg10[%c128, %c0_23] : memref<144x256xbf16, #tpu.memory_space<vmem>>, vector<16x256xbf16>
    tpu.vector_store %arg10[%c128, %c0_23], %60 {strides = array<i32>} : memref<144x256xbf16, #tpu.memory_space<vmem>>, vector<16x256xbf16>,
    %c0_24 = arith.constant 0 : index
    %c0_25 = arith.constant 0 : index
    %62 = vector.load %arg3[%c0_24, %c0_25] : memref<16x144xbf16, #tpu.memory_space<vmem>>, vector<16x144xbf16>
    %c0_26 = arith.constant 0 : index
    %c0_27 = arith.constant 0 : index
    %63 = vector.load %arg10[%c0_26, %c0_27] : memref<144x256xbf16, #tpu.memory_space<vmem>>, vector<144x256xbf16>
    %cst_28 = arith.constant dense<0.000000e+00> : vector<16x256xf32>
    %64 = tpu.matmul %62, %63, %cst_28 {dimension_numbers = #tpu.dot_dimension_numbers<[1], [0], [0], [1], [0, 0, 1, 1], [], []>} : vector<16x144xbf16>, vector<144x256xbf16>, vector<16x256xf32> -> vector<16x256xf32>
    %c64_29 = arith.constant 64 : index
    %c0_30 = arith.constant 0 : index
    %65 = vector.load %arg10[%c64_29, %c0_30] : memref<144x256xbf16, #tpu.memory_space<vmem>>, vector<16x256xbf16>
    %66 = arith.extf %65 : vector<16x256xbf16> to vector<16x256xf32>
    %c0_31 = arith.constant 0 : index
    %c0_32 = arith.constant 0 : index
    %67 = vector.load %arg4[%c0_31, %c0_32] : memref<16x1xf32, #tpu.memory_space<vmem>>, vector<16x1xf32>
    %68 = vector.broadcast %67 : vector<16x1xf32> to vector<16x256xf32>
    %69 = arith.mulf %64, %68 : vector<16x256xf32>
    %70 = math.roundeven %69 : vector<16x256xf32>
    %c0_33 = arith.constant 0 : index
    %c0_34 = arith.constant 0 : index
    %71 = vector.load %arg5[%c0_33, %c0_34] : memref<16x1xf32, #tpu.memory_space<vmem>>, vector<16x1xf32>
    %72 = vector.broadcast %71 : vector<16x1xf32> to vector<16x256xf32>
    %73 = arith.mulf %70, %72 : vector<16x256xf32>
    %c0_35 = arith.constant 0 : index
    %c0_36 = arith.constant 0 : index
    %74 = vector.load %arg6[%c0_35, %c0_36] : memref<16x1xf32, #tpu.memory_space<vmem>>, vector<16x1xf32>
    %75 = vector.broadcast %74 : vector<16x1xf32> to vector<16x256xf32>
    %76 = arith.addf %73, %75 : vector<16x256xf32>
    %cst_37 = arith.constant 0.142857149 : f32
    %77 = vector.broadcast %cst_37 : f32 to vector<16x256xf32>
    %78 = arith.mulf %66, %77 : vector<16x256xf32>
    %79 = arith.addf %76, %78 : vector<16x256xf32>
    %cst_38 = arith.constant -1.000000e+00 : f32
    %cst_39 = arith.constant 1.000000e+00 : f32
    %80 = vector.broadcast %cst_38 : f32 to vector<16x256xf32>
    %81 = arith.maximumf %80, %79 : vector<16x256xf32>
    %82 = vector.broadcast %cst_39 : f32 to vector<16x256xf32>
    %83 = arith.minimumf %82, %81 : vector<16x256xf32>
    %c0_40 = arith.constant 0 : index
    %c0_41 = arith.constant 0 : index
    %c0_42 = arith.constant 0 : index
    %84 = vector.load %arg8[%c0_40, %c0_41, %c0_42] : memref<1x16x256xf32, #tpu.memory_space<vmem>>, vector<1x16x256xf32>
    %85 = vector.shape_cast %84 : vector<1x16x256xf32> to vector<16x256xf32>
    %86 = vector.shape_cast %83 : vector<16x256xf32> to vector<1x16x256xf32>
    tpu.vector_store %arg8[%c0_40, %c0_41, %c0_42], %86 {strides = array<i32>} : memref<1x16x256xf32, #tpu.memory_space<vmem>>, vector<1x16x256xf32>,
    %cst_43 = arith.constant 0.000000e+00 : f32
    %87 = vector.broadcast %cst_43 : f32 to vector<1x1x128xf32>
    %88 = math.absf %83 : vector<16x256xf32>
    %89 = vector.shape_cast %88 : vector<16x256xf32> to vector<1x16x256xf32>
    %cst_44 = arith.constant dense<0xFF800000> : vector<1xf32>
    %90 = vector.multi_reduction <maximumf>, %89, %cst_44 [1, 2] : vector<1x16x256xf32> to vector<1xf32>
    %91 = vector.shape_cast %90 : vector<1xf32> to vector<1x1x1xf32>
    %92 = vector.extract %91[0, 0, 0] : f32 from vector<1x1x1xf32>
    %93 = vector.broadcast %92 : f32 to vector<1x1x128xf32>
    %94 = arith.addf %87, %93 : vector<1x1x128xf32>
    %c0_45 = arith.constant 0 : index
    %c0_46 = arith.constant 0 : index
    %c0_47 = arith.constant 0 : index
    %95 = vector.load %arg9[%c0_45, %c0_46, %c0_47] : memref<1x1x128xf32, #tpu.memory_space<vmem>>, vector<1x1x128xf32>
    tpu.vector_store %arg9[%c0_45, %c0_46, %c0_47], %94 {strides = array<i32>} : memref<1x1x128xf32, #tpu.memory_space<vmem>>, vector<1x1x128xf32>,
    return
  }
  func.func @transform_0(%arg0: i32) -> (i32, i32) {
    %c0_i32 = arith.constant 0 : i32
    %c0_i32_0 = arith.constant 0 : i32
    %c0_i32_1 = arith.constant 0 : i32
    return %c0_i32, %c0_i32_0 : i32, i32
  }
  func.func @transform_1(%arg0: i32) -> (i32, i32, i32) {
    %c0_i32 = arith.constant 0 : i32
    %c0_i32_0 = arith.constant 0 : i32
    %c0_i32_1 = arith.constant 0 : i32
    return %arg0, %c0_i32, %c0_i32_0 : i32, i32, i32
  }
  func.func @transform_2(%arg0: i32) -> (i32, i32) {
    %c0_i32 = arith.constant 0 : i32
    %c0_i32_0 = arith.constant 0 : i32
    %c0_i32_1 = arith.constant 0 : i32
    return %c0_i32, %c0_i32_0 : i32, i32
  }
  func.func @transform_3(%arg0: i32) -> (i32, i32) {
    %c0_i32 = arith.constant 0 : i32
    %c0_i32_0 = arith.constant 0 : i32
    %c0_i32_1 = arith.constant 0 : i32
    return %c0_i32, %c0_i32_0 : i32, i32
  }
  func.func @transform_4(%arg0: i32) -> (i32, i32) {
    %c0_i32 = arith.constant 0 : i32
    %c0_i32_0 = arith.constant 0 : i32
    %c0_i32_1 = arith.constant 0 : i32
    return %c0_i32, %c0_i32_0 : i32, i32
  }
  func.func @transform_5(%arg0: i32) -> (i32, i32) {
    %c0_i32 = arith.constant 0 : i32
    %c0_i32_0 = arith.constant 0 : i32
    %c0_i32_1 = arith.constant 0 : i32
    return %c0_i32, %c0_i32_0 : i32, i32
  }
  func.func @transform_6(%arg0: i32) -> (i32, i32) {
    %c0_i32 = arith.constant 0 : i32
    %c0_i32_0 = arith.constant 0 : i32
    %c0_i32_1 = arith.constant 0 : i32
    return %c0_i32, %c0_i32_0 : i32, i32
  }
  func.func @transform_7(%arg0: i32) -> (i32, i32, i32) {
    %c0_i32 = arith.constant 0 : i32
    %c0_i32_0 = arith.constant 0 : i32
    %c0_i32_1 = arith.constant 0 : i32
    return %arg0, %c0_i32, %c0_i32_0 : i32, i32, i32
  }
  func.func @transform_8(%arg0: i32) -> (i32, i32, i32) {
    %c0_i32 = arith.constant 0 : i32
    %c0_i32_0 = arith.constant 0 : i32
    %c0_i32_1 = arith.constant 0 : i32
    return %arg0, %c0_i32, %c0_i32_0 : i32, i32, i32
  }
}

module attributes {stable_mosaic.version = 11 : i64} {
  func.func @_stage_kernel(%arg0: i32, %arg1: memref<1x1xf32, #tpu.memory_space<smem>>, %arg2: memref<1x16x256xf32, #tpu.memory_space<vmem>>, %arg3: memref<16x144xbf16, #tpu.memory_space<vmem>>, %arg4: memref<16x1xf32, #tpu.memory_space<vmem>>, %arg5: memref<16x1xf32, #tpu.memory_space<vmem>>, %arg6: memref<16x1xf32, #tpu.memory_space<vmem>>, %arg7: memref<9x256xf32, #tpu.memory_space<vmem>>, %arg8: memref<1x16x256xf32, #tpu.memory_space<vmem>>, %arg9: memref<1x1x128xf32, #tpu.memory_space<vmem>>, %arg10: memref<144x256xbf16, #tpu.memory_space<vmem>>) attributes {dimension_semantics = [#tpu.dimension_semantics<parallel>], iteration_bounds = array<i64: 2>, scalar_prefetch = 0 : i64, scratch_operands = 1 : i64, tpu.core_type = #tpu.core_type<tc>, window_params = [{transform_indices = @transform_0, window_bounds = array<i64: 1, 1>}, {transform_indices = @transform_1, window_bounds = array<i64: 1, 16, 256>}, {pipeline_mode = #tpu.pipeline_mode<synchronous>, transform_indices = @transform_2, window_bounds = array<i64: 16, 144>}, {pipeline_mode = #tpu.pipeline_mode<synchronous>, transform_indices = @transform_3, window_bounds = array<i64: 16, 1>}, {pipeline_mode = #tpu.pipeline_mode<synchronous>, transform_indices = @transform_4, window_bounds = array<i64: 16, 1>}, {pipeline_mode = #tpu.pipeline_mode<synchronous>, transform_indices = @transform_5, window_bounds = array<i64: 16, 1>}, {pipeline_mode = #tpu.pipeline_mode<synchronous>, transform_indices = @transform_6, window_bounds = array<i64: 9, 256>}, {transform_indices = @transform_7, window_bounds = array<i64: 1, 16, 256>}, {transform_indices = @transform_8, window_bounds = array<i64: 1, 1, 128>}]} {
    %c0 = arith.constant 0 : index
    %c0_0 = arith.constant 0 : index
    %0 = memref.load %arg1[%c0, %c0_0] : memref<1x1xf32, #tpu.memory_space<smem>>
    %cst = arith.constant 7.000000e+00 : f32
    %1 = arith.divf %cst, %0 : f32
    %c0_1 = arith.constant 0 : index
    %c0_2 = arith.constant 0 : index
    %c0_3 = arith.constant 0 : index
    %2 = vector.load %arg2[%c0_1, %c0_2, %c0_3] : memref<1x16x256xf32, #tpu.memory_space<vmem>>, vector<1x16x256xf32>
    %3 = vector.shape_cast %2 : vector<1x16x256xf32> to vector<16x256xf32>
    %cst_4 = arith.constant 0.000000e+00 : f32
    %4 = arith.subf %cst_4, %0 : f32
    %5 = vector.broadcast %4 : f32 to vector<16x256xf32>
    %6 = arith.maximumf %5, %3 : vector<16x256xf32>
    %7 = vector.broadcast %0 : f32 to vector<16x256xf32>
    %8 = arith.minimumf %7, %6 : vector<16x256xf32>
    %9 = vector.broadcast %1 : f32 to vector<16x256xf32>
    %10 = arith.mulf %8, %9 : vector<16x256xf32>
    %11 = math.roundeven %10 : vector<16x256xf32>
    %c17_i32 = arith.constant 17 : i32
    %12 = tpu.dynamic_rotate %11 by %c17_i32 dim 1 : vector<16x256xf32>, i32 -> vector<16x256xf32>
    %c0_5 = arith.constant 0 : index
    %c0_6 = arith.constant 0 : index
    %13 = vector.load %arg7[%c0_5, %c0_6] : memref<9x256xf32, #tpu.memory_space<vmem>>, vector<1x256xf32>
    %14 = vector.broadcast %13 : vector<1x256xf32> to vector<16x256xf32>
    %15 = arith.mulf %12, %14 : vector<16x256xf32>
    %16 = arith.truncf %15 : vector<16x256xf32> to vector<16x256xbf16>
    %c0_7 = arith.constant 0 : index
    %c0_8 = arith.constant 0 : index
    %17 = vector.load %arg10[%c0_7, %c0_8] : memref<144x256xbf16, #tpu.memory_space<vmem>>, vector<16x256xbf16>
    tpu.vector_store %arg10[%c0_7, %c0_8], %16 {strides = array<i32>} : memref<144x256xbf16, #tpu.memory_space<vmem>>, vector<16x256xbf16>,
    %c16_i32 = arith.constant 16 : i32
    %18 = tpu.dynamic_rotate %11 by %c16_i32 dim 1 : vector<16x256xf32>, i32 -> vector<16x256xf32>
    %c1 = arith.constant 1 : index
    %c0_9 = arith.constant 0 : index
    %19 = vector.load %arg7[%c1, %c0_9] : memref<9x256xf32, #tpu.memory_space<vmem>>, vector<1x256xf32>
    %20 = vector.broadcast %19 : vector<1x256xf32> to vector<16x256xf32>
    %21 = arith.mulf %18, %20 : vector<16x256xf32>
    %22 = arith.truncf %21 : vector<16x256xf32> to vector<16x256xbf16>
    %c16 = arith.constant 16 : index
    %c0_10 = arith.constant 0 : index
    %23 = vector.load %arg10[%c16, %c0_10] : memref<144x256xbf16, #tpu.memory_space<vmem>>, vector<16x256xbf16>
    tpu.vector_store %arg10[%c16, %c0_10], %22 {strides = array<i32>} : memref<144x256xbf16, #tpu.memory_space<vmem>>, vector<16x256xbf16>,
    %c15_i32 = arith.constant 15 : i32
    %24 = tpu.dynamic_rotate %11 by %c15_i32 dim 1 : vector<16x256xf32>, i32 -> vector<16x256xf32>
    %c2 = arith.constant 2 : index
    %c0_11 = arith.constant 0 : index
    %25 = vector.load %arg7[%c2, %c0_11] : memref<9x256xf32, #tpu.memory_space<vmem>>, vector<1x256xf32>
    %26 = vector.broadcast %25 : vector<1x256xf32> to vector<16x256xf32>
    %27 = arith.mulf %24, %26 : vector<16x256xf32>
    %28 = arith.truncf %27 : vector<16x256xf32> to vector<16x256xbf16>
    %c32 = arith.constant 32 : index
    %c0_12 = arith.constant 0 : index
    %29 = vector.load %arg10[%c32, %c0_12] : memref<144x256xbf16, #tpu.memory_space<vmem>>, vector<16x256xbf16>
    tpu.vector_store %arg10[%c32, %c0_12], %28 {strides = array<i32>} : memref<144x256xbf16, #tpu.memory_space<vmem>>, vector<16x256xbf16>,
    %c1_i32 = arith.constant 1 : i32
    %30 = tpu.dynamic_rotate %11 by %c1_i32 dim 1 : vector<16x256xf32>, i32 -> vector<16x256xf32>
    %c3 = arith.constant 3 : index
    %c0_13 = arith.constant 0 : index
    %31 = vector.load %arg7[%c3, %c0_13] : memref<9x256xf32, #tpu.memory_space<vmem>>, vector<1x256xf32>
    %32 = vector.broadcast %31 : vector<1x256xf32> to vector<16x256xf32>
    %33 = arith.mulf %30, %32 : vector<16x256xf32>
    %34 = arith.truncf %33 : vector<16x256xf32> to vector<16x256xbf16>
    %c48 = arith.constant 48 : index
    %c0_14 = arith.constant 0 : index
    %35 = vector.load %arg10[%c48, %c0_14] : memref<144x256xbf16, #tpu.memory_space<vmem>>, vector<16x256xbf16>
    tpu.vector_store %arg10[%c48, %c0_14], %34 {strides = array<i32>} : memref<144x256xbf16, #tpu.memory_space<vmem>>, vector<16x256xbf16>,
    %36 = arith.truncf %11 : vector<16x256xf32> to vector<16x256xbf16>
    %c64 = arith.constant 64 : index
    %c0_15 = arith.constant 0 : index
    %37 = vector.load %arg10[%c64, %c0_15] : memref<144x256xbf16, #tpu.memory_space<vmem>>, vector<16x256xbf16>
    tpu.vector_store %arg10[%c64, %c0_15], %36 {strides = array<i32>} : memref<144x256xbf16, #tpu.memory_space<vmem>>, vector<16x256xbf16>,
    %c255_i32 = arith.constant 255 : i32
    %38 = tpu.dynamic_rotate %11 by %c255_i32 dim 1 : vector<16x256xf32>, i32 -> vector<16x256xf32>
    %c5 = arith.constant 5 : index
    %c0_16 = arith.constant 0 : index
    %39 = vector.load %arg7[%c5, %c0_16] : memref<9x256xf32, #tpu.memory_space<vmem>>, vector<1x256xf32>
    %40 = vector.broadcast %39 : vector<1x256xf32> to vector<16x256xf32>
    %41 = arith.mulf %38, %40 : vector<16x256xf32>
    %42 = arith.truncf %41 : vector<16x256xf32> to vector<16x256xbf16>
    %c80 = arith.constant 80 : index
    %c0_17 = arith.constant 0 : index
    %43 = vector.load %arg10[%c80, %c0_17] : memref<144x256xbf16, #tpu.memory_space<vmem>>, vector<16x256xbf16>
    tpu.vector_store %arg10[%c80, %c0_17], %42 {strides = array<i32>} : memref<144x256xbf16, #tpu.memory_space<vmem>>, vector<16x256xbf16>,
    %c241_i32 = arith.constant 241 : i32
    %44 = tpu.dynamic_rotate %11 by %c241_i32 dim 1 : vector<16x256xf32>, i32 -> vector<16x256xf32>
    %c6 = arith.constant 6 : index
    %c0_18 = arith.constant 0 : index
    %45 = vector.load %arg7[%c6, %c0_18] : memref<9x256xf32, #tpu.memory_space<vmem>>, vector<1x256xf32>
    %46 = vector.broadcast %45 : vector<1x256xf32> to vector<16x256xf32>
    %47 = arith.mulf %44, %46 : vector<16x256xf32>
    %48 = arith.truncf %47 : vector<16x256xf32> to vector<16x256xbf16>
    %c96 = arith.constant 96 : index
    %c0_19 = arith.constant 0 : index
    %49 = vector.load %arg10[%c96, %c0_19] : memref<144x256xbf16, #tpu.memory_space<vmem>>, vector<16x256xbf16>
    tpu.vector_store %arg10[%c96, %c0_19], %48 {strides = array<i32>} : memref<144x256xbf16, #tpu.memory_space<vmem>>, vector<16x256xbf16>,
    %c240_i32 = arith.constant 240 : i32
    %50 = tpu.dynamic_rotate %11 by %c240_i32 dim 1 : vector<16x256xf32>, i32 -> vector<16x256xf32>
    %c7 = arith.constant 7 : index
    %c0_20 = arith.constant 0 : index
    %51 = vector.load %arg7[%c7, %c0_20] : memref<9x256xf32, #tpu.memory_space<vmem>>, vector<1x256xf32>
    %52 = vector.broadcast %51 : vector<1x256xf32> to vector<16x256xf32>
    %53 = arith.mulf %50, %52 : vector<16x256xf32>
    %54 = arith.truncf %53 : vector<16x256xf32> to vector<16x256xbf16>
    %c112 = arith.constant 112 : index
    %c0_21 = arith.constant 0 : index
    %55 = vector.load %arg10[%c112, %c0_21] : memref<144x256xbf16, #tpu.memory_space<vmem>>, vector<16x256xbf16>
    tpu.vector_store %arg10[%c112, %c0_21], %54 {strides = array<i32>} : memref<144x256xbf16, #tpu.memory_space<vmem>>, vector<16x256xbf16>,
    %c239_i32 = arith.constant 239 : i32
    %56 = tpu.dynamic_rotate %11 by %c239_i32 dim 1 : vector<16x256xf32>, i32 -> vector<16x256xf32>
    %c8 = arith.constant 8 : index
    %c0_22 = arith.constant 0 : index
    %57 = vector.load %arg7[%c8, %c0_22] : memref<9x256xf32, #tpu.memory_space<vmem>>, vector<1x256xf32>
    %58 = vector.broadcast %57 : vector<1x256xf32> to vector<16x256xf32>
    %59 = arith.mulf %56, %58 : vector<16x256xf32>
    %60 = arith.truncf %59 : vector<16x256xf32> to vector<16x256xbf16>
    %c128 = arith.constant 128 : index
    %c0_23 = arith.constant 0 : index
    %61 = vector.load %arg10[%c128, %c0_23] : memref<144x256xbf16, #tpu.memory_space<vmem>>, vector<16x256xbf16>
    tpu.vector_store %arg10[%c128, %c0_23], %60 {strides = array<i32>} : memref<144x256xbf16, #tpu.memory_space<vmem>>, vector<16x256xbf16>,
    %c0_24 = arith.constant 0 : index
    %c0_25 = arith.constant 0 : index
    %62 = vector.load %arg3[%c0_24, %c0_25] : memref<16x144xbf16, #tpu.memory_space<vmem>>, vector<16x144xbf16>
    %c0_26 = arith.constant 0 : index
    %c0_27 = arith.constant 0 : index
    %63 = vector.load %arg10[%c0_26, %c0_27] : memref<144x256xbf16, #tpu.memory_space<vmem>>, vector<144x256xbf16>
    %cst_28 = arith.constant dense<0.000000e+00> : vector<16x256xf32>
    %64 = tpu.matmul %62, %63, %cst_28 {dimension_numbers = #tpu.dot_dimension_numbers<[1], [0], [0], [1], [0, 0, 1, 1], [], []>} : vector<16x144xbf16>, vector<144x256xbf16>, vector<16x256xf32> -> vector<16x256xf32>
    %c64_29 = arith.constant 64 : index
    %c0_30 = arith.constant 0 : index
    %65 = vector.load %arg10[%c64_29, %c0_30] : memref<144x256xbf16, #tpu.memory_space<vmem>>, vector<16x256xbf16>
    %66 = arith.extf %65 : vector<16x256xbf16> to vector<16x256xf32>
    %c0_31 = arith.constant 0 : index
    %c0_32 = arith.constant 0 : index
    %67 = vector.load %arg4[%c0_31, %c0_32] : memref<16x1xf32, #tpu.memory_space<vmem>>, vector<16x1xf32>
    %68 = vector.broadcast %67 : vector<16x1xf32> to vector<16x256xf32>
    %69 = arith.mulf %64, %68 : vector<16x256xf32>
    %70 = math.roundeven %69 : vector<16x256xf32>
    %c0_33 = arith.constant 0 : index
    %c0_34 = arith.constant 0 : index
    %71 = vector.load %arg5[%c0_33, %c0_34] : memref<16x1xf32, #tpu.memory_space<vmem>>, vector<16x1xf32>
    %72 = vector.broadcast %71 : vector<16x1xf32> to vector<16x256xf32>
    %73 = arith.mulf %70, %72 : vector<16x256xf32>
    %c0_35 = arith.constant 0 : index
    %c0_36 = arith.constant 0 : index
    %74 = vector.load %arg6[%c0_35, %c0_36] : memref<16x1xf32, #tpu.memory_space<vmem>>, vector<16x1xf32>
    %75 = vector.broadcast %74 : vector<16x1xf32> to vector<16x256xf32>
    %76 = arith.addf %73, %75 : vector<16x256xf32>
    %cst_37 = arith.constant 0.142857149 : f32
    %77 = vector.broadcast %cst_37 : f32 to vector<16x256xf32>
    %78 = arith.mulf %66, %77 : vector<16x256xf32>
    %79 = arith.addf %76, %78 : vector<16x256xf32>
    %cst_38 = arith.constant -1.000000e+00 : f32
    %cst_39 = arith.constant 1.000000e+00 : f32
    %80 = vector.broadcast %cst_38 : f32 to vector<16x256xf32>
    %81 = arith.maximumf %80, %79 : vector<16x256xf32>
    %82 = vector.broadcast %cst_39 : f32 to vector<16x256xf32>
    %83 = arith.minimumf %82, %81 : vector<16x256xf32>
    %c0_40 = arith.constant 0 : index
    %c0_41 = arith.constant 0 : index
    %c0_42 = arith.constant 0 : index
    %84 = vector.load %arg8[%c0_40, %c0_41, %c0_42] : memref<1x16x256xf32, #tpu.memory_space<vmem>>, vector<1x16x256xf32>
    %85 = vector.shape_cast %84 : vector<1x16x256xf32> to vector<16x256xf32>
    %86 = vector.shape_cast %83 : vector<16x256xf32> to vector<1x16x256xf32>
    tpu.vector_store %arg8[%c0_40, %c0_41, %c0_42], %86 {strides = array<i32>} : memref<1x16x256xf32, #tpu.memory_space<vmem>>, vector<1x16x256xf32>,
    %cst_43 = arith.constant 0.000000e+00 : f32
    %87 = vector.broadcast %cst_43 : f32 to vector<1x1x128xf32>
    %88 = math.absf %83 : vector<16x256xf32>
    %89 = vector.shape_cast %88 : vector<16x256xf32> to vector<1x16x256xf32>
    %cst_44 = arith.constant dense<0xFF800000> : vector<1xf32>
    %90 = vector.multi_reduction <maximumf>, %89, %cst_44 [1, 2] : vector<1x16x256xf32> to vector<1xf32>
    %91 = vector.shape_cast %90 : vector<1xf32> to vector<1x1x1xf32>
    %92 = vector.extract %91[0, 0, 0] : f32 from vector<1x1x1xf32>
    %93 = vector.broadcast %92 : f32 to vector<1x1x128xf32>
    %94 = arith.addf %87, %93 : vector<1x1x128xf32>
    %c0_45 = arith.constant 0 : index
    %c0_46 = arith.constant 0 : index
    %c0_47 = arith.constant 0 : index
    %95 = vector.load %arg9[%c0_45, %c0_46, %c0_47] : memref<1x1x128xf32, #tpu.memory_space<vmem>>, vector<1x1x128xf32>
    tpu.vector_store %arg9[%c0_45, %c0_46, %c0_47], %94 {strides = array<i32>} : memref<1x1x128xf32, #tpu.memory_space<vmem>>, vector<1x1x128xf32>,
    return
  }
  func.func @transform_0(%arg0: i32) -> (i32, i32) {
    %c0_i32 = arith.constant 0 : i32
    %c0_i32_0 = arith.constant 0 : i32
    %c0_i32_1 = arith.constant 0 : i32
    return %c0_i32, %c0_i32_0 : i32, i32
  }
  func.func @transform_1(%arg0: i32) -> (i32, i32, i32) {
    %c0_i32 = arith.constant 0 : i32
    %c0_i32_0 = arith.constant 0 : i32
    %c0_i32_1 = arith.constant 0 : i32
    return %arg0, %c0_i32, %c0_i32_0 : i32, i32, i32
  }
  func.func @transform_2(%arg0: i32) -> (i32, i32) {
    %c0_i32 = arith.constant 0 : i32
    %c0_i32_0 = arith.constant 0 : i32
    %c0_i32_1 = arith.constant 0 : i32
    return %c0_i32, %c0_i32_0 : i32, i32
  }
  func.func @transform_3(%arg0: i32) -> (i32, i32) {
    %c0_i32 = arith.constant 0 : i32
    %c0_i32_0 = arith.constant 0 : i32
    %c0_i32_1 = arith.constant 0 : i32
    return %c0_i32, %c0_i32_0 : i32, i32
  }
  func.func @transform_4(%arg0: i32) -> (i32, i32) {
    %c0_i32 = arith.constant 0 : i32
    %c0_i32_0 = arith.constant 0 : i32
    %c0_i32_1 = arith.constant 0 : i32
    return %c0_i32, %c0_i32_0 : i32, i32
  }
  func.func @transform_5(%arg0: i32) -> (i32, i32) {
    %c0_i32 = arith.constant 0 : i32
    %c0_i32_0 = arith.constant 0 : i32
    %c0_i32_1 = arith.constant 0 : i32
    return %c0_i32, %c0_i32_0 : i32, i32
  }
  func.func @transform_6(%arg0: i32) -> (i32, i32) {
    %c0_i32 = arith.constant 0 : i32
    %c0_i32_0 = arith.constant 0 : i32
    %c0_i32_1 = arith.constant 0 : i32
    return %c0_i32, %c0_i32_0 : i32, i32
  }
  func.func @transform_7(%arg0: i32) -> (i32, i32, i32) {
    %c0_i32 = arith.constant 0 : i32
    %c0_i32_0 = arith.constant 0 : i32
    %c0_i32_1 = arith.constant 0 : i32
    return %arg0, %c0_i32, %c0_i32_0 : i32, i32, i32
  }
  func.func @transform_8(%arg0: i32) -> (i32, i32, i32) {
    %c0_i32 = arith.constant 0 : i32
    %c0_i32_0 = arith.constant 0 : i32
    %c0_i32_1 = arith.constant 0 : i32
    return %arg0, %c0_i32, %c0_i32_0 : i32, i32, i32
  }
}

</mosaic_0001>

<llo_original>
// kernel: basic_block_forward.3
$region0: #{basic_block_forward.3}
  #allocation0 [shape = 'u32[]', space=smem, size = 0x4, offset = 0x4, fixed_abs, tag = 'smem constant byte address 0x4 - core index']
  #allocation1 [shape = 'u32[144,128]{1,0:T(1,128)}', space=vmem, size = 0x12000, scoped, tag = 'internal scratch']
  %s0 = inlined_call_operand.vmem [shape: f32[2,16,256], index: 0, kind: input, shape index: {}]
  %s1 = inlined_call_operand.vmem [shape: f32[1,128], index: 1, kind: output, shape index: {}]
  %s2 = sld [smem:[#allocation0]]
  $region41: #{basic_block_forward.3} parent=0
    _
  %s4 = ssub.s32 1, %s2
  %s5 = scalar_select 0, %s4, %s2
  loop: start=0, step=1, limit=4
  $region2: #{basic_block_forward.3} parent=0 // loop_pre_header
    _
  $region3: #{basic_block_forward.3} parent=0 // loop_header
    %s7 = sphi 0, %s11
    %p8 = scmp.ge.s32.totalorder %s7, 4
    %s17 = sphi 0, %s19
    %s20 = sphi 0, %s17
    %s21 = sphi 0, %s20
    %s37 = sphi 0, %s21
    %s41 = sphi 0, %s41
    %s43 = sphi 0, %s41
    %s44 = sphi 0, %s43
    %s58 = sphi 0, %s44
  $region4: #{basic_block_forward.3} parent=0 // loop_header_branch
    %10 = sbr.rel (%p8) target = $region8
  $region5: #{basic_block_forward.3} parent=0 // loop_body
    %s12 = ssub.s32 %s7, 1
    %s13 = ssub.s32 %s7, 2
    %s14 = sadd.s32 %s7, 1
    %s15 = ssub.s32 %s7, %s14
    %p16 = scmp.eq.s32.totalorder %s15, 0
    %s18 = sadd.s32 %s17, 1
    %s19 = scalar_select %p16, %s17, %s18
    %p22 = pneg %p16
    %p23 = scmp.eq.s32.totalorder %s7, 1
    %p24 = por %p22, %p23
    %p25 = scmp.ne.s32.totalorder %s17, %s20
    %p26 = scmp.eq.s32.totalorder %s7, 0
    %p27 = por %p25, %p26
    %p28 = scmp.ne.s32.totalorder %s17, %s20
    %p29 = scmp.eq.s32.totalorder %s12, 1
    %p30 = por %p28, %p29
    %p31 = scmp.ne.s32.totalorder %s20, %s21
    %p32 = scmp.eq.s32.totalorder %s12, 0
    %p33 = por %p31, %p32
    %p34 = scmp.ne.s32.totalorder %s20, %s21
    %p35 = scmp.eq.s32.totalorder %s13, 1
    %p36 = por %p34, %p35
    %p38 = scmp.ne.s32.totalorder %s21, %s37
    %p39 = scmp.eq.s32.totalorder %s13, 0
    %p40 = por %p38, %p39
    %s42 = sadd.s32 %s41, 1
    %p45 = scmp.eq.s32.totalorder %s7, 1
    %p46 = scmp.ne.s32.totalorder %s41, %s43
    %p47 = scmp.eq.s32.totalorder %s7, 0
    %p48 = por %p46, %p47
    %p49 = scmp.ne.s32.totalorder %s41, %s43
    %p50 = scmp.eq.s32.totalorder %s12, 1
    %p51 = por %p49, %p50
    %p52 = scmp.ne.s32.totalorder %s43, %s44
    %p53 = scmp.eq.s32.totalorder %s12, 0
    %p54 = por %p52, %p53
    %p55 = scmp.ne.s32.totalorder %s43, %s44
    %p56 = scmp.eq.s32.totalorder %s13, 1
    %p57 = por %p55, %p56
    %p59 = scmp.ne.s32.totalorder %s44, %s58
    %p60 = scmp.eq.s32.totalorder %s13, 0
    %p61 = por %p59, %p60
    %p62 = scmp.le.s32.totalorder 1, %s7
    %p63 = scmp.lt.s32.totalorder %s7, 3
    %p64 = pnand %p62, %p63
    %p65 = pneg %p64
    // Predicated region
    $region9: #{basic_block_forward.3} parent=5 // pred_check
      _
    $region10: #{basic_block_forward.3} parent=5 // pred_check_branch
      %67 = sbr.rel (%p64) target = $region12
    $region11: #{basic_block_forward.3} parent=5 // pred_region
      %s68 = ssub.s32 %s7, 1
    $region12: #{basic_block_forward.3} parent=5 // pred_fallthru
      _
    %p69 = scmp.lt.s32.totalorder %s7, 2
    // Predicated region
    $region13: #{basic_block_forward.3} parent=5 // pred_check
      %p70 = pneg %p69
    $region14: #{basic_block_forward.3} parent=5 // pred_check_branch
      %72 = sbr.rel (%p70) target = $region16
    $region15: #{basic_block_forward.3} parent=5 // pred_region
      // Predicated region
      $region17: #{basic_block_forward.3} parent=15 // pred_check
        %p73 = pneg %p27
      $region18: #{basic_block_forward.3} parent=15 // pred_check_branch
        %75 = sbr.rel (%p73) target = $region20
      $region19: #{basic_block_forward.3} parent=15 // pred_region
        %p76 = scmp.lt.s32.totalorder %s7, 1
        %s77 = scalar_select %p76, %s7, 1
        %s78 = smul.addr %s77, 4
        %s79 = smul.addr %s78, 8
        %s80 = scalar_lea.vmem %s0, %s79
      $region20: #{basic_block_forward.3} parent=15 // pred_fallthru
        _
    $region16: #{basic_block_forward.3} parent=5 // pred_fallthru
      _
    %p81 = scmp.le.s32.totalorder 1, %s7
    %p82 = scmp.lt.s32.totalorder %s7, 3
    %p83 = pnand %p81, %p82
    %p84 = pneg %p83
    // Predicated region
    $region21: #{basic_block_forward.3} parent=5 // pred_check
      _
    $region22: #{basic_block_forward.3} parent=5 // pred_check_branch
      %86 = sbr.rel (%p83) target = $region24
    $region23: #{basic_block_forward.3} parent=5 // pred_region
      %s87 = ssub.s32 %s7, 1
      %p88 = scmp.lt.s32.totalorder %s12, 1
      %s89 = scalar_select %p88, %s12, 1
      %s90 = smul.addr %s89, 4
      %s91 = smul.addr %s90, 8
      %s92 = scalar_lea.vmem %s0, %s91
      %p93 = pneg %p33
      %p94 = pneg %p30
      %p95 = pneg %p54
      %p96 = pneg %p51
      %p97 = scmp.lt.s32.totalorder %s12, 1
      %s98 = scalar_select %p97, %s12, 1
      %s99 = smul.addr %s98, 4
      %s100 = smul.addr %s99, 8
      %s101 = scalar_lea.vmem %s0, %s100
      %p102 = scmp.eq.s32.totalorder %s12, 0
      // Predicated region
      $region25: #{basic_block_forward.3} parent=23 // pred_check
        %p103 = pneg %p102
      $region26: #{basic_block_forward.3} parent=23 // pred_check_branch
        %105 = sbr.rel (%p103) target = $region28
      $region27: #{basic_block_forward.3} parent=23 // pred_region
        %106 = vst [vmem:[%s1] sm:$0x1] 0.0
      $region28: #{basic_block_forward.3} parent=23 // pred_fallthru
        _
      %v107 = vld [vmem:[%s1] sm:$0x1]
      %v108 = vld [vmem:[%s101] sm:$0xff]
      %v109 = vld [vmem:[%s101 + $0x8] sm:$0xff]
      %v110 = vld [vmem:[%s101 + $0x10] sm:$0xff]
      %v111 = vld [vmem:[%s101 + $0x18] sm:$0xff]
      %v112 = vand.u32 2147483647, %v108
      %v113 = vand.u32 2147483647, %v109
      %v114 = vand.u32 2147483647, %v110
      %v115 = vand.u32 2147483647, %v111
      %v116 = vmax.f32 %v112, %v113
      %v117 = vmax.f32 %v114, %v115
      %v118 = vmax.f32 %v116, %v117
      %119 = vmax.xlane.f32.xlu0 %v118
      %v120 = vpop.xlane.xlu0 %119
      %v121 = vrot.slane %v120, 4
      %v122 = vmax.f32 %v120, %v121
      %v123 = vrot.slane %v122, 2
      %v124 = vmax.f32 %v122, %v123
      %v125 = vrot.slane %v124, 1
      %v126 = vmax.f32 %v124, %v125
      %s127 = vtos %v126
      %v128 = vstv %s127
      %v129 = vmax.f32 %v107, %v128
      %130 = vst [vmem:[%s1] sm:$0x1] %v129
      // Predicated region
      $region29: #{basic_block_forward.3} parent=23 // pred_check
        %p131 = pneg %p51
      $region30: #{basic_block_forward.3} parent=23 // pred_check_branch
        %133 = sbr.rel (%p131) target = $region32
      $region31: #{basic_block_forward.3} parent=23 // pred_region
        _
      $region32: #{basic_block_forward.3} parent=23 // pred_fallthru
        _
      // Predicated region
      $region33: #{basic_block_forward.3} parent=23 // pred_check
        %p134 = pneg %p51
      $region34: #{basic_block_forward.3} parent=23 // pred_check_branch
        %136 = sbr.rel (%p134) target = $region36
      $region35: #{basic_block_forward.3} parent=23 // pred_region
        _
      $region36: #{basic_block_forward.3} parent=23 // pred_fallthru
        _
    $region24: #{basic_block_forward.3} parent=5 // pred_fallthru
      _
    %p137 = scmp.le.s32.totalorder 2, %s7
    // Predicated region
    $region37: #{basic_block_forward.3} parent=5 // pred_check
      %p138 = pneg %p137
    $region38: #{basic_block_forward.3} parent=5 // pred_check_branch
      %140 = sbr.rel (%p138) target = $region40
    $region39: #{basic_block_forward.3} parent=5 // pred_region
      %s141 = ssub.s32 %s7, 2
    $region40: #{basic_block_forward.3} parent=5 // pred_fallthru
      _
  $region6: #{basic_block_forward.3} parent=0 // loop_footer
    %s11 = sadd.s32 1, %s7
  $region7: #{basic_block_forward.3} parent=0 // loop_footer_branch
    %6 = sbr.rel target = $region3
  $region8: #{basic_block_forward.3} parent=0 // loop_exit
    _

// kernel: basic_block_forward.4
$region0: #{basic_block_forward.4}
  #allocation0 [shape = 'u32[]', space=smem, size = 0x4, offset = 0x4, fixed_abs, tag = 'smem constant byte address 0x4 - core index']
  #allocation1 [shape = 'u32[144,128]{1,0:T(1,128)}', space=vmem, size = 0x12000, scoped, tag = 'internal scratch']
  #allocation2 [shape = 'bf16[144,256]{1,0:T(16,128)(2,1)}', space=vmem, size = 0x12000, scoped, tag = 'scratch operand']
  #allocation3 [shape = 'f32[1,1]{1,0:T(1,128)S(6)}', space=smem, size = 0x200, scoped, tag = 'scoped memory for basic_block_forward.4']
  %s0 = inlined_call_operand.<no memory space> [shape: f32[1,1], index: 0, kind: input, shape index: {}]
  %s1 = inlined_call_operand.vmem [shape: f32[2,16,256], index: 1, kind: input, shape index: {}]
  %s2 = inlined_call_operand.vmem [shape: bf16[16,144], index: 2, kind: input, shape index: {}]
  %s3 = inlined_call_operand.vmem [shape: f32[16,1], index: 3, kind: input, shape index: {}]
  %s4 = inlined_call_operand.vmem [shape: f32[16,1], index: 4, kind: input, shape index: {}]
  %s5 = inlined_call_operand.vmem [shape: f32[16,1], index: 5, kind: input, shape index: {}]
  %s6 = inlined_call_operand.vmem [shape: f32[9,256], index: 6, kind: input, shape index: {}]
  %s7 = inlined_call_operand.vmem [shape: f32[2,16,256], index: 7, kind: output, shape index: {0}]
  %s8 = inlined_call_operand.vmem [shape: f32[2,1,128], index: 8, kind: output, shape index: {1}]
  %9 = xla_tuple %s7, %s8
  %s10 = sld [smem:[#allocation0]]
  $region69: #{basic_block_forward.4} parent=0
    _
  %s12 = ssub.s32 1, %s10
  %s13 = scalar_select 0, %s12, %s10
  %14 = sst [smem:[#allocation3]] %s0
  loop: start=0, step=1, limit=4
  $region2: #{basic_block_forward.4} parent=0 // loop_pre_header
    _
  $region3: #{basic_block_forward.4} parent=0 // loop_header
    %s16 = sphi 0, %s20
    %p17 = scmp.ge.s32.totalorder %s16, 4
    %s24 = sphi 0, %s24
    %s26 = sphi 0, %s24
    %s27 = sphi 0, %s26
    %s41 = sphi 0, %s27
    %s47 = sphi 0, %s49
    %s50 = sphi 0, %s47
    %s51 = sphi 0, %s50
    %s67 = sphi 0, %s51
    %s71 = sphi 0, %s71
    %s73 = sphi 0, %s71
    %s74 = sphi 0, %s73
    %s88 = sphi 0, %s74
    %s92 = sphi 0, %s92
    %s94 = sphi 0, %s92
    %s95 = sphi 0, %s94
    %s109 = sphi 0, %s95
    %s113 = sphi 0, %s113
    %s115 = sphi 0, %s113
    %s116 = sphi 0, %s115
    %s130 = sphi 0, %s116
    %s134 = sphi 0, %s134
    %s136 = sphi 0, %s134
    %s137 = sphi 0, %s136
    %s151 = sphi 0, %s137
    %s155 = sphi 0, %s155
    %s157 = sphi 0, %s155
    %s158 = sphi 0, %s157
    %s172 = sphi 0, %s158
    %s178 = sphi 0, %s180
    %s181 = sphi 0, %s178
    %s182 = sphi 0, %s181
    %s198 = sphi 0, %s182
    %s204 = sphi 0, %s206
    %s207 = sphi 0, %s204
    %s208 = sphi 0, %s207
    %s224 = sphi 0, %s208
  $region4: #{basic_block_forward.4} parent=0 // loop_header_branch
    %19 = sbr.rel (%p17) target = $region8
  $region5: #{basic_block_forward.4} parent=0 // loop_body
    %s21 = ssub.s32 %s16, 1
    %s22 = ssub.s32 %s16, 2
    %s23 = sadd.s32 %s16, 1
    %s25 = sadd.s32 %s24, 1
    %p28 = scmp.eq.s32.totalorder %s16, 1
    %p29 = scmp.ne.s32.totalorder %s24, %s26
    %p30 = scmp.eq.s32.totalorder %s16, 0
    %p31 = por %p29, %p30
    %p32 = scmp.ne.s32.totalorder %s24, %s26
    %p33 = scmp.eq.s32.totalorder %s21, 1
    %p34 = por %p32, %p33
    %p35 = scmp.ne.s32.totalorder %s26, %s27
    %p36 = scmp.eq.s32.totalorder %s21, 0
    %p37 = por %p35, %p36
    %p38 = scmp.ne.s32.totalorder %s26, %s27
    %p39 = scmp.eq.s32.totalorder %s22, 1
    %p40 = por %p38, %p39
    %p42 = scmp.ne.s32.totalorder %s27, %s41
    %p43 = scmp.eq.s32.totalorder %s22, 0
    %p44 = por %p42, %p43
    %s45 = ssub.s32 %s16, %s23
    %p46 = scmp.eq.s32.totalorder %s45, 0
    %s48 = sadd.s32 %s47, 1
    %s49 = scalar_select %p46, %s47, %s48
    %p52 = pneg %p46
    %p53 = scmp.eq.s32.totalorder %s16, 1
    %p54 = por %p52, %p53
    %p55 = scmp.ne.s32.totalorder %s47, %s50
    %p56 = scmp.eq.s32.totalorder %s16, 0
    %p57 = por %p55, %p56
    %p58 = scmp.ne.s32.totalorder %s47, %s50
    %p59 = scmp.eq.s32.totalorder %s21, 1
    %p60 = por %p58, %p59
    %p61 = scmp.ne.s32.totalorder %s50, %s51
    %p62 = scmp.eq.s32.totalorder %s21, 0
    %p63 = por %p61, %p62
    %p64 = scmp.ne.s32.totalorder %s50, %s51
    %p65 = scmp.eq.s32.totalorder %s22, 1
    %p66 = por %p64, %p65
    %p68 = scmp.ne.s32.totalorder %s51, %s67
    %p69 = scmp.eq.s32.totalorder %s22, 0
    %p70 = por %p68, %p69
    %s72 = sadd.s32 %s71, 1
    %p75 = scmp.eq.s32.totalorder %s16, 1
    %p76 = scmp.ne.s32.totalorder %s71, %s73
    %p77 = scmp.eq.s32.totalorder %s16, 0
    %p78 = por %p76, %p77
    %p79 = scmp.ne.s32.totalorder %s71, %s73
    %p80 = scmp.eq.s32.totalorder %s21, 1
    %p81 = por %p79, %p80
    %p82 = scmp.ne.s32.totalorder %s73, %s74
    %p83 = scmp.eq.s32.totalorder %s21, 0
    %p84 = por %p82, %p83
    %p85 = scmp.ne.s32.totalorder %s73, %s74
    %p86 = scmp.eq.s32.totalorder %s22, 1
    %p87 = por %p85, %p86
    %p89 = scmp.ne.s32.totalorder %s74, %s88
    %p90 = scmp.eq.s32.totalorder %s22, 0
    %p91 = por %p89, %p90
    %s93 = sadd.s32 %s92, 1
    %p96 = scmp.eq.s32.totalorder %s16, 1
    %p97 = scmp.ne.s32.totalorder %s92, %s94
    %p98 = scmp.eq.s32.totalorder %s16, 0
    %p99 = por %p97, %p98
    %p100 = scmp.ne.s32.totalorder %s92, %s94
    %p101 = scmp.eq.s32.totalorder %s21, 1
    %p102 = por %p100, %p101
    %p103 = scmp.ne.s32.totalorder %s94, %s95
    %p104 = scmp.eq.s32.totalorder %s21, 0
    %p105 = por %p103, %p104
    %p106 = scmp.ne.s32.totalorder %s94, %s95
    %p107 = scmp.eq.s32.totalorder %s22, 1
    %p108 = por %p106, %p107
    %p110 = scmp.ne.s32.totalorder %s95, %s109
    %p111 = scmp.eq.s32.totalorder %s22, 0
    %p112 = por %p110, %p111
    %s114 = sadd.s32 %s113, 1
    %p117 = scmp.eq.s32.totalorder %s16, 1
    %p118 = scmp.ne.s32.totalorder %s113, %s115
    %p119 = scmp.eq.s32.totalorder %s16, 0
    %p120 = por %p118, %p119
    %p121 = scmp.ne.s32.totalorder %s113, %s115
    %p122 = scmp.eq.s32.totalorder %s21, 1
    %p123 = por %p121, %p122
    %p124 = scmp.ne.s32.totalorder %s115, %s116
    %p125 = scmp.eq.s32.totalorder %s21, 0
    %p126 = por %p124, %p125
    %p127 = scmp.ne.s32.totalorder %s115, %s116
    %p128 = scmp.eq.s32.totalorder %s22, 1
    %p129 = por %p127, %p128
    %p131 = scmp.ne.s32.totalorder %s116, %s130
    %p132 = scmp.eq.s32.totalorder %s22, 0
    %p133 = por %p131, %p132
    %s135 = sadd.s32 %s134, 1
    %p138 = scmp.eq.s32.totalorder %s16, 1
    %p139 = scmp.ne.s32.totalorder %s134, %s136
    %p140 = scmp.eq.s32.totalorder %s16, 0
    %p141 = por %p139, %p140
    %p142 = scmp.ne.s32.totalorder %s134, %s136
    %p143 = scmp.eq.s32.totalorder %s21, 1
    %p144 = por %p142, %p143
    %p145 = scmp.ne.s32.totalorder %s136, %s137
    %p146 = scmp.eq.s32.totalorder %s21, 0
    %p147 = por %p145, %p146
    %p148 = scmp.ne.s32.totalorder %s136, %s137
    %p149 = scmp.eq.s32.totalorder %s22, 1
    %p150 = por %p148, %p149
    %p152 = scmp.ne.s32.totalorder %s137, %s151
    %p153 = scmp.eq.s32.totalorder %s22, 0
    %p154 = por %p152, %p153
    %s156 = sadd.s32 %s155, 1
    %p159 = scmp.eq.s32.totalorder %s16, 1
    %p160 = scmp.ne.s32.totalorder %s155, %s157
    %p161 = scmp.eq.s32.totalorder %s16, 0
    %p162 = por %p160, %p161
    %p163 = scmp.ne.s32.totalorder %s155, %s157
    %p164 = scmp.eq.s32.totalorder %s21, 1
    %p165 = por %p163, %p164
    %p166 = scmp.ne.s32.totalorder %s157, %s158
    %p167 = scmp.eq.s32.totalorder %s21, 0
    %p168 = por %p166, %p167
    %p169 = scmp.ne.s32.totalorder %s157, %s158
    %p170 = scmp.eq.s32.totalorder %s22, 1
    %p171 = por %p169, %p170
    %p173 = scmp.ne.s32.totalorder %s158, %s172
    %p174 = scmp.eq.s32.totalorder %s22, 0
    %p175 = por %p173, %p174
    %s176 = ssub.s32 %s16, %s23
    %p177 = scmp.eq.s32.totalorder %s176, 0
    %s179 = sadd.s32 %s178, 1
    %s180 = scalar_select %p177, %s178, %s179
    %p183 = pneg %p177
    %p184 = scmp.eq.s32.totalorder %s16, 1
    %p185 = por %p183, %p184
    %p186 = scmp.ne.s32.totalorder %s178, %s181
    %p187 = scmp.eq.s32.totalorder %s16, 0
    %p188 = por %p186, %p187
    %p189 = scmp.ne.s32.totalorder %s178, %s181
    %p190 = scmp.eq.s32.totalorder %s21, 1
    %p191 = por %p189, %p190
    %p192 = scmp.ne.s32.totalorder %s181, %s182
    %p193 = scmp.eq.s32.totalorder %s21, 0
    %p194 = por %p192, %p193
    %p195 = scmp.ne.s32.totalorder %s181, %s182
    %p196 = scmp.eq.s32.totalorder %s22, 1
    %p197 = por %p195, %p196
    %p199 = scmp.ne.s32.totalorder %s182, %s198
    %p200 = scmp.eq.s32.totalorder %s22, 0
    %p201 = por %p199, %p200
    %s202 = ssub.s32 %s16, %s23
    %p203 = scmp.eq.s32.totalorder %s202, 0
    %s205 = sadd.s32 %s204, 1
    %s206 = scalar_select %p203, %s204, %s205
    %p209 = pneg %p203
    %p210 = scmp.eq.s32.totalorder %s16, 1
    %p211 = por %p209, %p210
    %p212 = scmp.ne.s32.totalorder %s204, %s207
    %p213 = scmp.eq.s32.totalorder %s16, 0
    %p214 = por %p212, %p213
    %p215 = scmp.ne.s32.totalorder %s204, %s207
    %p216 = scmp.eq.s32.totalorder %s21, 1
    %p217 = por %p215, %p216
    %p218 = scmp.ne.s32.totalorder %s207, %s208
    %p219 = scmp.eq.s32.totalorder %s21, 0
    %p220 = por %p218, %p219
    %p221 = scmp.ne.s32.totalorder %s207, %s208
    %p222 = scmp.eq.s32.totalorder %s22, 1
    %p223 = por %p221, %p222
    %p225 = scmp.ne.s32.totalorder %s208, %s224
    %p226 = scmp.eq.s32.totalorder %s22, 0
    %p227 = por %p225, %p226
    %p228 = scmp.le.s32.totalorder 1, %s16
    %p229 = scmp.lt.s32.totalorder %s16, 3
    %p230 = pnand %p228, %p229
    %p231 = pneg %p230
    // Predicated region
    $region9: #{basic_block_forward.4} parent=5 // pred_check
      _
    $region10: #{basic_block_forward.4} parent=5 // pred_check_branch
      %233 = sbr.rel (%p230) target = $region12
    $region11: #{basic_block_forward.4} parent=5 // pred_region
      %s234 = ssub.s32 %s16, 1
      // Predicated region
      $region13: #{basic_block_forward.4} parent=11 // pred_check
        %p235 = pneg %p37
      $region14: #{basic_block_forward.4} parent=11 // pred_check_branch
        %237 = sbr.rel (%p235) target = $region16
      $region15: #{basic_block_forward.4} parent=11 // pred_region
        _
      $region16: #{basic_block_forward.4} parent=11 // pred_fallthru
        _
      // Predicated region
      $region17: #{basic_block_forward.4} parent=11 // pred_check
        %p238 = pneg %p84
      $region18: #{basic_block_forward.4} parent=11 // pred_check_branch
        %240 = sbr.rel (%p238) target = $region20
      $region19: #{basic_block_forward.4} parent=11 // pred_region
        _
      $region20: #{basic_block_forward.4} parent=11 // pred_fallthru
        _
      // Predicated region
      $region21: #{basic_block_forward.4} parent=11 // pred_check
        %p241 = pneg %p105
      $region22: #{basic_block_forward.4} parent=11 // pred_check_branch
        %243 = sbr.rel (%p241) target = $region24
      $region23: #{basic_block_forward.4} parent=11 // pred_region
        _
      $region24: #{basic_block_forward.4} parent=11 // pred_fallthru
        _
      // Predicated region
      $region25: #{basic_block_forward.4} parent=11 // pred_check
        %p244 = pneg %p126
      $region26: #{basic_block_forward.4} parent=11 // pred_check_branch
        %246 = sbr.rel (%p244) target = $region28
      $region27: #{basic_block_forward.4} parent=11 // pred_region
        _
      $region28: #{basic_block_forward.4} parent=11 // pred_fallthru
        _
      // Predicated region
      $region29: #{basic_block_forward.4} parent=11 // pred_check
        %p247 = pneg %p147
      $region30: #{basic_block_forward.4} parent=11 // pred_check_branch
        %249 = sbr.rel (%p247) target = $region32
      $region31: #{basic_block_forward.4} parent=11 // pred_region
        _
      $region32: #{basic_block_forward.4} parent=11 // pred_fallthru
        _
      // Predicated region
      $region33: #{basic_block_forward.4} parent=11 // pred_check
        %p250 = pneg %p168
      $region34: #{basic_block_forward.4} parent=11 // pred_check_branch
        %252 = sbr.rel (%p250) target = $region36
      $region35: #{basic_block_forward.4} parent=11 // pred_region
        _
      $region36: #{basic_block_forward.4} parent=11 // pred_fallthru
        _
    $region12: #{basic_block_forward.4} parent=5 // pred_fallthru
      _
    %p253 = scmp.lt.s32.totalorder %s16, 2
    // Predicated region
    $region37: #{basic_block_forward.4} parent=5 // pred_check
      %p254 = pneg %p253
    $region38: #{basic_block_forward.4} parent=5 // pred_check_branch
      %256 = sbr.rel (%p254) target = $region40
    $region39: #{basic_block_forward.4} parent=5 // pred_region
      // Predicated region
      $region41: #{basic_block_forward.4} parent=39 // pred_check
        %p257 = pneg %p57
      $region42: #{basic_block_forward.4} parent=39 // pred_check_branch
        %259 = sbr.rel (%p257) target = $region44
      $region43: #{basic_block_forward.4} parent=39 // pred_region
        %p260 = scmp.lt.s32.totalorder %s16, 1
        %s261 = scalar_select %p260, %s16, 1
        %s262 = smul.addr %s261, 4
        %s263 = smul.addr %s262, 8
        %s264 = scalar_lea.vmem %s1, %s263
      $region44: #{basic_block_forward.4} parent=39 // pred_fallthru
        _
    $region40: #{basic_block_forward.4} parent=5 // pred_fallthru
      _
    %p265 = scmp.le.s32.totalorder 1, %s16
    %p266 = scmp.lt.s32.totalorder %s16, 3
    %p267 = pnand %p265, %p266
    %p268 = pneg %p267
    // Predicated region
    $region45: #{basic_block_forward.4} parent=5 // pred_check
      _
    $region46: #{basic_block_forward.4} parent=5 // pred_check_branch
      %270 = sbr.rel (%p267) target = $region48
    $region47: #{basic_block_forward.4} parent=5 // pred_region
      %s271 = ssub.s32 %s16, 1
      %p272 = pneg %p37
      %p273 = pneg %p34
      %p274 = scmp.lt.s32.totalorder %s21, 1
      %s275 = scalar_select %p274, %s21, 1
      %s276 = smul.addr %s275, 4
      %s277 = smul.addr %s276, 8
      %s278 = scalar_lea.vmem %s1, %s277
      %p279 = pneg %p63
      %p280 = pneg %p60
      %p281 = pneg %p84
      %p282 = pneg %p81
      %p283 = pneg %p105
      %p284 = pneg %p102
      %p285 = pneg %p126
      %p286 = pneg %p123
      %p287 = pneg %p147
      %p288 = pneg %p144
      %p289 = pneg %p168
      %p290 = pneg %p165
      %p291 = pneg %p194
      %p292 = pneg %p191
      %p293 = scmp.lt.s32.totalorder %s21, 1
      %s294 = scalar_select %p293, %s21, 1
      %s295 = smul.addr %s294, 4
      %s296 = smul.addr %s295, 8
      %s297 = scalar_lea.vmem %s7, %s296
      %p298 = pneg %p220
      %p299 = pneg %p217
      %p300 = scmp.lt.s32.totalorder %s21, 1
      %s301 = scalar_select %p300, %s21, 1
      %s302 = scalar_lea.vmem %s8, %s301
      %p303 = scmp.lt.s32.totalorder %s21, 1
      %s304 = scalar_select %p303, %s21, 1
      %s305 = smul.addr %s304, 4
      %s306 = smul.addr %s305, 8
      %s307 = scalar_lea.vmem %s1, %s306
      %p308 = scmp.lt.s32.totalorder %s21, 1
      %s309 = scalar_select %p308, %s21, 1
      %s310 = smul.addr %s309, 4
      %s311 = smul.addr %s310, 8
      %s312 = scalar_lea.vmem %s7, %s311
      %p313 = scmp.lt.s32.totalorder %s21, 1
      %s314 = scalar_select %p313, %s21, 1
      %s315 = scalar_lea.vmem %s8, %s314
      %s317 = sld [smem:[#allocation3]]
      %v318 = vstv %s317
      %v319 = vrcp.pop %v318
      %s320 = vtos %v319
      %s321 = smul.f32 7.0, %s320
      %v322 = vld [vmem:[%s307] sm:$0xff]
      %v323 = vld [vmem:[%s307 + $0x8] sm:$0xff]
      %v324 = vld [vmem:[%s307 + $0x10] sm:$0xff]
      %v325 = vld [vmem:[%s307 + $0x18] sm:$0xff]
      %s326 = ssub.f32 0.0, %s317
      %v327 = vstv %s326
      %v328 = vmax.f32 %v327, %v322
      %v329 = vmax.f32 %v327, %v323
      %v330 = vmax.f32 %v327, %v324
      %v331 = vmax.f32 %v327, %v325
      %v332 = vstv %s317
      %v333 = vmin.f32 %v332, %v328
      %v334 = vmin.f32 %v332, %v329
      %v335 = vmin.f32 %v332, %v330
      %v336 = vmin.f32 %v332, %v331
      %v337 = vstv %s321
      %v338 = vmul.f32 %v333, %v337
      %v339 = vmul.f32 %v334, %v337
      %v340 = vmul.f32 %v335, %v337
      %v341 = vmul.f32 %v336, %v337
      %v342 = vround.ne.pseudo %v338
      %v343 = vround.ne.pseudo %v339
      %v344 = vround.ne.pseudo %v340
      %v345 = vround.ne.pseudo %v341
      %346 = vrot.lane.b32.xlu0 %v342, 17
      %v347 = vpop.permute.xlu0 %346
      %348 = vrot.lane.b32.xlu0 %v344, 17
      %v349 = vpop.permute.xlu0 %348
      %350 = vrot.lane.b32.xlu0 %v343, 17
      %v351 = vpop.permute.xlu0 %350
      %352 = vrot.lane.b32.xlu0 %v345, 17
      %v353 = vpop.permute.xlu0 %352
      %v354 = vlaneseq
      %v355 = vand.u32 %v354, 127
      %vm356 = vcmp.lt.s32.totalorder %v355, 17
      %v357 = vsel %vm356, %v347, %v351
      %v358 = vsel %vm356, %v349, %v353
      %v359 = vsel %vm356, %v351, %v347
      %v360 = vsel %vm356, %v353, %v349
      %v361 = vld [vmem:[%s6] ss:$8 sm:$0x3]
      %v363 = vlaneseq
      %v364 = vshrl.u32 %v363, 7
      %v365 = vsub.s32 0, %v364
      %v366 = vrot.slane %v361, %v365
      %v367 = vlaneseq
      %v368 = vshrl.u32 %v367, 7
      %v369 = vsub.s32 1, %v368
      %v370 = vrot.slane %v361, %v369
      %v373 = vmul.f32 %v359, %v366
      %v374 = vmul.f32 %v357, %v370
      %v375 = vmul.f32 %v360, %v366
      %v376 = vmul.f32 %v358, %v370
      %v377 = vpack.c.bf16 %v375, %v373
      %v378 = vpack.c.bf16 %v376, %v374
      %379 = vst [vmem:[#allocation2] sm:$0xff] %v377
      %380 = vst [vmem:[#allocation2 + $0x8] sm:$0xff] %v378
      %381 = vrot.lane.b32.xlu0 %v342, 16
      %v382 = vpop.permute.xlu0 %381
      %383 = vrot.lane.b32.xlu0 %v344, 16
      %v384 = vpop.permute.xlu0 %383
      %385 = vrot.lane.b32.xlu0 %v343, 16
      %v386 = vpop.permute.xlu0 %385
      %387 = vrot.lane.b32.xlu0 %v345, 16
      %v388 = vpop.permute.xlu0 %387
      %vm389 = vcmp.lt.s32.totalorder %v355, 16
      %v390 = vsel %vm389, %v382, %v386
      %v391 = vsel %vm389, %v384, %v388
      %v392 = vsel %vm389, %v386, %v382
      %v393 = vsel %vm389, %v388, %v384
      %s394 = scalar_lea.vmem %s6, 1
      %v395 = vld [vmem:[%s394] ss:$8 sm:$0x3]
      %v397 = vlaneseq
      %v398 = vshrl.u32 %v397, 7
      %v399 = vsub.s32 0, %v398
      %v400 = vrot.slane %v395, %v399
      %v401 = vlaneseq
      %v402 = vshrl.u32 %v401, 7
      %v403 = vsub.s32 1, %v402
      %v404 = vrot.slane %v395, %v403
      %v407 = vmul.f32 %v392, %v400
      %v408 = vmul.f32 %v390, %v404
      %v409 = vmul.f32 %v393, %v400
      %v410 = vmul.f32 %v391, %v404
      %v411 = vpack.c.bf16 %v409, %v407
      %v412 = vpack.c.bf16 %v410, %v408
      %413 = vst [vmem:[#allocation2 + $0x10] sm:$0xff] %v411
      %414 = vst [vmem:[#allocation2 + $0x18] sm:$0xff] %v412
      %415 = vrot.lane.b32.xlu0 %v342, 15
      %v416 = vpop.permute.xlu0 %415
      %417 = vrot.lane.b32.xlu0 %v344, 15
      %v418 = vpop.permute.xlu0 %417
      %419 = vrot.lane.b32.xlu0 %v343, 15
      %v420 = vpop.permute.xlu0 %419
      %421 = vrot.lane.b32.xlu0 %v345, 15
      %v422 = vpop.permute.xlu0 %421
      %vm423 = vcmp.lt.s32.totalorder %v355, 15
      %v424 = vsel %vm423, %v416, %v420
      %v425 = vsel %vm423, %v418, %v422
      %v426 = vsel %vm423, %v420, %v416
      %v427 = vsel %vm423, %v422, %v418
      %s428 = scalar_lea.vmem %s6, 2
      %v429 = vld [vmem:[%s428] ss:$8 sm:$0x3]
      %v431 = vlaneseq
      %v432 = vshrl.u32 %v431, 7
      %v433 = vsub.s32 0, %v432
      %v434 = vrot.slane %v429, %v433
      %v435 = vlaneseq
      %v436 = vshrl.u32 %v435, 7
      %v437 = vsub.s32 1, %v436
      %v438 = vrot.slane %v429, %v437
      %v441 = vmul.f32 %v426, %v434
      %v442 = vmul.f32 %v424, %v438
      %v443 = vmul.f32 %v427, %v434
      %v444 = vmul.f32 %v425, %v438
      %v445 = vpack.c.bf16 %v443, %v441
      %v446 = vpack.c.bf16 %v444, %v442
      %447 = vst [vmem:[#allocation2 + $0x20] sm:$0xff] %v445
      %448 = vst [vmem:[#allocation2 + $0x28] sm:$0xff] %v446
      %449 = vrot.lane.b32.xlu0 %v342, 1
      %v450 = vpop.permute.xlu0 %449
      %451 = vrot.lane.b32.xlu0 %v344, 1
      %v452 = vpop.permute.xlu0 %451
      %453 = vrot.lane.b32.xlu0 %v343, 1
      %v454 = vpop.permute.xlu0 %453
      %455 = vrot.lane.b32.xlu0 %v345, 1
      %v456 = vpop.permute.xlu0 %455
      %vm457 = vcmp.lt.s32.totalorder %v355, 1
      %v458 = vsel %vm457, %v450, %v454
      %v459 = vsel %vm457, %v452, %v456
      %v460 = vsel %vm457, %v454, %v450
      %v461 = vsel %vm457, %v456, %v452
      %s462 = scalar_lea.vmem %s6, 3
      %v463 = vld [vmem:[%s462] ss:$8 sm:$0x3]
      %v465 = vlaneseq
      %v466 = vshrl.u32 %v465, 7
      %v467 = vsub.s32 0, %v466
      %v468 = vrot.slane %v463, %v467
      %v469 = vlaneseq
      %v470 = vshrl.u32 %v469, 7
      %v471 = vsub.s32 1, %v470
      %v472 = vrot.slane %v463, %v471
      %v475 = vmul.f32 %v460, %v468
      %v476 = vmul.f32 %v458, %v472
      %v477 = vmul.f32 %v461, %v468
      %v478 = vmul.f32 %v459, %v472
      %v479 = vpack.c.bf16 %v477, %v475
      %v480 = vpack.c.bf16 %v478, %v476
      %481 = vst [vmem:[#allocation2 + $0x30] sm:$0xff] %v479
      %482 = vst [vmem:[#allocation2 + $0x38] sm:$0xff] %v480
      %v483 = vpack.c.bf16 %v344, %v342
      %v484 = vpack.c.bf16 %v345, %v343
      %485 = vst [vmem:[#allocation2 + $0x40] sm:$0xff] %v483
      %486 = vst [vmem:[#allocation2 + $0x48] sm:$0xff] %v484
      %487 = vrot.lane.b32.xlu0 %v342, 127
      %v488 = vpop.permute.xlu0 %487
      %489 = vrot.lane.b32.xlu0 %v344, 127
      %v490 = vpop.permute.xlu0 %489
      %491 = vrot.lane.b32.xlu0 %v343, 127
      %v492 = vpop.permute.xlu0 %491
      %493 = vrot.lane.b32.xlu0 %v345, 127
      %v494 = vpop.permute.xlu0 %493
      %vm495 = vcmp.lt.s32.totalorder %v355, 127
      %v496 = vsel %vm495, %v488, %v492
      %v497 = vsel %vm495, %v490, %v494
      %v498 = vsel %vm495, %v492, %v488
      %v499 = vsel %vm495, %v494, %v490
      %s500 = scalar_lea.vmem %s6, 5
      %v501 = vld [vmem:[%s500] ss:$8 sm:$0x3]
      %v503 = vlaneseq
      %v504 = vshrl.u32 %v503, 7
      %v505 = vsub.s32 0, %v504
      %v506 = vrot.slane %v501, %v505
      %v507 = vlaneseq
      %v508 = vshrl.u32 %v507, 7
      %v509 = vsub.s32 1, %v508
      %v510 = vrot.slane %v501, %v509
      %v513 = vmul.f32 %v496, %v506
      %v514 = vmul.f32 %v498, %v510
      %v515 = vmul.f32 %v497, %v506
      %v516 = vmul.f32 %v499, %v510
      %v517 = vpack.c.bf16 %v515, %v513
      %v518 = vpack.c.bf16 %v516, %v514
      %519 = vst [vmem:[#allocation2 + $0x50] sm:$0xff] %v517
      %520 = vst [vmem:[#allocation2 + $0x58] sm:$0xff] %v518
      %521 = vrot.lane.b32.xlu0 %v342, 113
      %v522 = vpop.permute.xlu0 %521
      %523 = vrot.lane.b32.xlu0 %v344, 113
      %v524 = vpop.permute.xlu0 %523
      %525 = vrot.lane.b32.xlu0 %v343, 113
      %v526 = vpop.permute.xlu0 %525
      %527 = vrot.lane.b32.xlu0 %v345, 113
      %v528 = vpop.permute.xlu0 %527
      %vm529 = vcmp.lt.s32.totalorder %v355, 113
      %v530 = vsel %vm529, %v522, %v526
      %v531 = vsel %vm529, %v524, %v528
      %v532 = vsel %vm529, %v526, %v522
      %v533 = vsel %vm529, %v528, %v524
      %s534 = scalar_lea.vmem %s6, 6
      %v535 = vld [vmem:[%s534] ss:$8 sm:$0x3]
      %v537 = vlaneseq
      %v538 = vshrl.u32 %v537, 7
      %v539 = vsub.s32 0, %v538
      %v540 = vrot.slane %v535, %v539
      %v541 = vlaneseq
      %v542 = vshrl.u32 %v541, 7
      %v543 = vsub.s32 1, %v542
      %v544 = vrot.slane %v535, %v543
      %v547 = vmul.f32 %v530, %v540
      %v548 = vmul.f32 %v532, %v544
      %v549 = vmul.f32 %v531, %v540
      %v550 = vmul.f32 %v533, %v544
      %v551 = vpack.c.bf16 %v549, %v547
      %v552 = vpack.c.bf16 %v550, %v548
      %553 = vst [vmem:[#allocation2 + $0x60] sm:$0xff] %v551
      %554 = vst [vmem:[#allocation2 + $0x68] sm:$0xff] %v552
      %555 = vrot.lane.b32.xlu0 %v342, 112
      %v556 = vpop.permute.xlu0 %555
      %557 = vrot.lane.b32.xlu0 %v344, 112
      %v558 = vpop.permute.xlu0 %557
      %559 = vrot.lane.b32.xlu0 %v343, 112
      %v560 = vpop.permute.xlu0 %559
      %561 = vrot.lane.b32.xlu0 %v345, 112
      %v562 = vpop.permute.xlu0 %561
      %vm563 = vcmp.lt.s32.totalorder %v355, 112
      %v564 = vsel %vm563, %v556, %v560
      %v565 = vsel %vm563, %v558, %v562
      %v566 = vsel %vm563, %v560, %v556
      %v567 = vsel %vm563, %v562, %v558
      %s568 = scalar_lea.vmem %s6, 7
      %v569 = vld [vmem:[%s568] ss:$8 sm:$0x3]
      %v571 = vlaneseq
      %v572 = vshrl.u32 %v571, 7
      %v573 = vsub.s32 0, %v572
      %v574 = vrot.slane %v569, %v573
      %v575 = vlaneseq
      %v576 = vshrl.u32 %v575, 7
      %v577 = vsub.s32 1, %v576
      %v578 = vrot.slane %v569, %v577
      %v581 = vmul.f32 %v564, %v574
      %v582 = vmul.f32 %v566, %v578
      %v583 = vmul.f32 %v565, %v574
      %v584 = vmul.f32 %v567, %v578
      %v585 = vpack.c.bf16 %v583, %v581
      %v586 = vpack.c.bf16 %v584, %v582
      %587 = vst [vmem:[#allocation2 + $0x70] sm:$0xff] %v585
      %588 = vst [vmem:[#allocation2 + $0x78] sm:$0xff] %v586
      %589 = vrot.lane.b32.xlu0 %v342, 111
      %v590 = vpop.permute.xlu0 %589
      %591 = vrot.lane.b32.xlu0 %v344, 111
      %v592 = vpop.permute.xlu0 %591
      %593 = vrot.lane.b32.xlu0 %v343, 111
      %v594 = vpop.permute.xlu0 %593
      %595 = vrot.lane.b32.xlu0 %v345, 111
      %v596 = vpop.permute.xlu0 %595
      %vm597 = vcmp.lt.s32.totalorder %v355, 111
      %v598 = vsel %vm597, %v590, %v594
      %v599 = vsel %vm597, %v592, %v596
      %v600 = vsel %vm597, %v594, %v590
      %v601 = vsel %vm597, %v596, %v592
      %s602 = scalar_lea.vmem %s6, 16
      %v603 = vld [vmem:[%s602] ss:$8 sm:$0x3]
      %v605 = vlaneseq
      %v606 = vshrl.u32 %v605, 7
      %v607 = vsub.s32 0, %v606
      %v608 = vrot.slane %v603, %v607
      %v609 = vlaneseq
      %v610 = vshrl.u32 %v609, 7
      %v611 = vsub.s32 1, %v610
      %v612 = vrot.slane %v603, %v611
      %v615 = vmul.f32 %v598, %v608
      %v616 = vmul.f32 %v600, %v612
      %v617 = vmul.f32 %v599, %v608
      %v618 = vmul.f32 %v601, %v612
      %v619 = vpack.c.bf16 %v617, %v615
      %v620 = vpack.c.bf16 %v618, %v616
      %621 = vst [vmem:[#allocation2 + $0x80] sm:$0xff] %v619
      %622 = vst [vmem:[#allocation2 + $0x88] sm:$0xff] %v620
      %v623 = vld [vmem:[%s2] sm:$0xff]
      %v624 = vld [vmem:[%s2 + $0x8] sm:$0xff]
      %v625 = vld [vmem:[#allocation2] sm:$0xff]
      %v626 = vld [vmem:[#allocation2 + $0x8] sm:$0xff]
      %v627 = vld [vmem:[#allocation2 + $0x10] sm:$0xff]
      %v628 = vld [vmem:[#allocation2 + $0x18] sm:$0xff]
      %v629 = vld [vmem:[#allocation2 + $0x20] sm:$0xff]
      %v630 = vld [vmem:[#allocation2 + $0x28] sm:$0xff]
      %v631 = vld [vmem:[#allocation2 + $0x30] sm:$0xff]
      %v632 = vld [vmem:[#allocation2 + $0x38] sm:$0xff]
      %v633 = vld [vmem:[#allocation2 + $0x40] sm:$0xff]
      %v634 = vld [vmem:[#allocation2 + $0x48] sm:$0xff]
      %v635 = vld [vmem:[#allocation2 + $0x50] sm:$0xff]
      %v636 = vld [vmem:[#allocation2 + $0x58] sm:$0xff]
      %v637 = vld [vmem:[#allocation2 + $0x60] sm:$0xff]
      %v638 = vld [vmem:[#allocation2 + $0x68] sm:$0xff]
      %v639 = vld [vmem:[#allocation2 + $0x70] sm:$0xff]
      %v640 = vld [vmem:[#allocation2 + $0x78] sm:$0xff]
      %v641 = vld [vmem:[#allocation2 + $0x80] sm:$0xff]
      %v642 = vld [vmem:[#allocation2 + $0x88] sm:$0xff]
      %v645 = vunpack.c.l.b16 %v623
      %v646 = vunpack.c.h.b16 %v623
      %v647 = vunpack.c.l.b16 %v624
      %v648 = vunpack.c.h.b16 %v624
      %v649 = vpack.c.b16 %v647, %v645
      %v650 = vpack.c.b16 %v648, %v646
      %vm652 = vcmask 130048
      %v654 = vsel %vm652, %v650, 0
      %656 = vmatprep.subr.bf16.mxu0 %v626
      %657 = vmatpush1.bf16.msra.mxu0 %v625
      %658 = vmatprep.subr.bf16.mxu0 %v628
      %659 = vmatpush1.bf16.msra.mxu0 %v627
      %660 = vmatprep.subr.bf16.mxu0 %v630
      %661 = vmatpush1.bf16.msra.mxu0 %v629
      %662 = vmatprep.subr.bf16.mxu0 %v632
      %663 = vmatpush1.bf16.msra.mxu0 %v631
      %664 = vmatprep.subr.bf16.mxu0 %v634
      %665 = vmatpush1.bf16.msra.mxu0 %v633
      %666 = vmatprep.subr.bf16.mxu0 %v636
      %667 = vmatpush1.bf16.msra.mxu0 %v635
      %668 = vmatprep.subr.bf16.mxu0 %v638
      %669 = vmatpush1.bf16.msra.mxu0 %v637
      %670 = vmatprep.subr.bf16.mxu0 %v640
      %671 = vmatpush1.bf16.msra.mxu0 %v639
      %672 = vmatprep.subr.bf16.mxu0 %v642
      %673 = vmatpush1.bf16.msra.mxu0 %v641
      %674 = vmatprep.subr.bf16.mxu0 0
      %675 = vmatpush1.bf16.msra.mxu0 0
      %676 = vmatprep.subr.bf16.mxu0 0
      %677 = vmatpush1.bf16.msra.mxu0 0
      %678 = vmatprep.subr.bf16.mxu0 0
      %679 = vmatpush1.bf16.msra.mxu0 0
      %680 = vmatprep.subr.bf16.mxu0 0
      %681 = vmatpush1.bf16.msra.mxu0 0
      %682 = vmatprep.subr.bf16.mxu0 0
      %683 = vmatpush1.bf16.msra.mxu0 0
      %684 = vmatprep.subr.bf16.mxu0 0
      %685 = vmatpush1.bf16.msra.mxu0 0
      %686 = vmatprep.subr.bf16.mxu0 0
      %687 = vmatpush1.bf16.msra.mxu0 0
      %688 = vmatprep.mubr.bf16.mxu0 %v654
      %689 = vmatmul.mubr.bf16.gmra.mrb[0].mxu0 %v649
      %v690 = vpop.f32.mrb[0].mxu0
      %v691 = vadd.f32 0.0, %v690
      %v692 = vpop.f32.mrb[0].mxu0
      %v693 = vadd.f32 0.0, %v692
      %v694 = vpop.f32.mrb[0].mxu0
      %v695 = vadd.f32 0.0, %v694
      %v696 = vpop.f32.mrb[0].mxu0
      %v697 = vadd.f32 0.0, %v696
      %698 = vdwg.mxu0
      %v699 = vld [vmem:[#allocation2 + $0x40] sm:$0xff]
      %v700 = vld [vmem:[#allocation2 + $0x48] sm:$0xff]
      %v701 = vunpack.c.l.bf16 %v699
      %v702 = vunpack.c.l.bf16 %v700
      %v703 = vunpack.c.h.bf16 %v699
      %v704 = vunpack.c.h.bf16 %v700
      %v705 = vld [vmem:[%s3] sm:$0xff]
      %v706 = vld [vmem:[%s3 + $0x8] sm:$0xff]
      %708 = vset.pattern.permute.xlu0 0
      %709 = vperm.xlu0 %708, %v705
      %v710 = vpop.permute.xlu0 %709
      %713 = vset.pattern.permute.xlu0 0
      %714 = vperm.xlu0 %713, %v706
      %v715 = vpop.permute.xlu0 %714
      %v717 = vmul.f32 %v691, %v710
      %v718 = vmul.f32 %v693, %v710
      %v719 = vmul.f32 %v695, %v715
      %v720 = vmul.f32 %v697, %v715
      %v721 = vround.ne.pseudo %v717
      %v722 = vround.ne.pseudo %v718
      %v723 = vround.ne.pseudo %v719
      %v724 = vround.ne.pseudo %v720
      %v725 = vld [vmem:[%s4] sm:$0xff]
      %v726 = vld [vmem:[%s4 + $0x8] sm:$0xff]
      %728 = vset.pattern.permute.xlu0 0
      %729 = vperm.xlu0 %728, %v725
      %v730 = vpop.permute.xlu0 %729
      %733 = vset.pattern.permute.xlu0 0
      %734 = vperm.xlu0 %733, %v726
      %v735 = vpop.permute.xlu0 %734
      %v737 = vmul.f32 %v721, %v730
      %v738 = vmul.f32 %v722, %v730
      %v739 = vmul.f32 %v723, %v735
      %v740 = vmul.f32 %v724, %v735
      %v741 = vld [vmem:[%s5] sm:$0xff]
      %v742 = vld [vmem:[%s5 + $0x8] sm:$0xff]
      %744 = vset.pattern.permute.xlu0 0
      %745 = vperm.xlu0 %744, %v741
      %v746 = vpop.permute.xlu0 %745
      %749 = vset.pattern.permute.xlu0 0
      %750 = vperm.xlu0 %749, %v742
      %v751 = vpop.permute.xlu0 %750
      %v753 = vadd.f32 %v737, %v746
      %v754 = vadd.f32 %v738, %v746
      %v755 = vadd.f32 %v739, %v751
      %v756 = vadd.f32 %v740, %v751
      %v757 = vmul.f32 %v701, 0.14285715
      %v758 = vmul.f32 %v702, 0.14285715
      %v759 = vmul.f32 %v703, 0.14285715
      %v760 = vmul.f32 %v704, 0.14285715
      %v761 = vadd.f32 %v753, %v757
      %v762 = vadd.f32 %v754, %v758
      %v763 = vadd.f32 %v755, %v759
      %v764 = vadd.f32 %v756, %v760
      %v765 = vmax.f32 %v761, -1.0
      %v766 = vmax.f32 %v762, -1.0
      %v767 = vmax.f32 %v763, -1.0
      %v768 = vmax.f32 %v764, -1.0
      %v769 = vmin.f32 %v765, 1.0
      %v770 = vmin.f32 %v766, 1.0
      %v771 = vmin.f32 %v767, 1.0
      %v772 = vmin.f32 %v768, 1.0
      %773 = vst [vmem:[%s312] sm:$0xff] %v769
      %774 = vst [vmem:[%s312 + $0x8] sm:$0xff] %v770
      %775 = vst [vmem:[%s312 + $0x10] sm:$0xff] %v771
      %776 = vst [vmem:[%s312 + $0x18] sm:$0xff] %v772
      %v777 = vand.u32 2147483647, %v769
      %v778 = vand.u32 2147483647, %v770
      %v779 = vand.u32 2147483647, %v771
      %v780 = vand.u32 2147483647, %v772
      %v781 = vmax.f32 %v777, %v778
      %v782 = vmax.f32 %v779, %v780
      %v783 = vmax.f32 %v781, %v782
      %784 = vmax.xlane.f32.xlu0 %v783
      %v785 = vpop.xlane.xlu0 %784
      %v786 = vrot.slane %v785, 4
      %v787 = vmax.f32 %v785, %v786
      %v788 = vrot.slane %v787, 2
      %v789 = vmax.f32 %v787, %v788
      %v790 = vrot.slane %v789, 1
      %v791 = vmax.f32 %v789, %v790
      %s792 = vtos %v791
      %v793 = vstv %s792
      %v794 = vadd.f32 %v793, 0.0
      %795 = vst [vmem:[%s315] sm:$0x1] %v794
      %p796 = scmp.lt.s32.totalorder %s21, 1
      %s797 = scalar_select %p796, %s21, 1
      %s798 = smul.addr %s797, 4
      %s799 = smul.addr %s798, 8
      %s800 = scalar_lea.vmem %s7, %s799
      %p801 = scmp.lt.s32.totalorder %s21, 1
      %s802 = scalar_select %p801, %s21, 1
      %s803 = scalar_lea.vmem %s8, %s802
      // Predicated region
      $region49: #{basic_block_forward.4} parent=47 // pred_check
        %p804 = pneg %p191
      $region50: #{basic_block_forward.4} parent=47 // pred_check_branch
        %806 = sbr.rel (%p804) target = $region52
      $region51: #{basic_block_forward.4} parent=47 // pred_region
        _
      $region52: #{basic_block_forward.4} parent=47 // pred_fallthru
        _
      // Predicated region
      $region53: #{basic_block_forward.4} parent=47 // pred_check
        %p807 = pneg %p217
      $region54: #{basic_block_forward.4} parent=47 // pred_check_branch
        %809 = sbr.rel (%p807) target = $region56
      $region55: #{basic_block_forward.4} parent=47 // pred_region
        _
      $region56: #{basic_block_forward.4} parent=47 // pred_fallthru
        _
    $region48: #{basic_block_forward.4} parent=5 // pred_fallthru
      _
    %p810 = scmp.le.s32.totalorder 2, %s16
    // Predicated region
    $region57: #{basic_block_forward.4} parent=5 // pred_check
      %p811 = pneg %p810
    $region58: #{basic_block_forward.4} parent=5 // pred_check_branch
      %813 = sbr.rel (%p811) target = $region60
    $region59: #{basic_block_forward.4} parent=5 // pred_region
      %s814 = ssub.s32 %s16, 2
      // Predicated region
      $region61: #{basic_block_forward.4} parent=59 // pred_check
        %p815 = pneg %p197
      $region62: #{basic_block_forward.4} parent=59 // pred_check_branch
        %817 = sbr.rel (%p815) target = $region64
      $region63: #{basic_block_forward.4} parent=59 // pred_region
        %p818 = scmp.lt.s32.totalorder %s22, 1
        %s819 = scalar_select %p818, %s22, 1
        %s820 = smul.addr %s819, 4
        %s821 = smul.addr %s820, 8
        %s822 = scalar_lea.vmem %s7, %s821
      $region64: #{basic_block_forward.4} parent=59 // pred_fallthru
        _
      // Predicated region
      $region65: #{basic_block_forward.4} parent=59 // pred_check
        %p823 = pneg %p223
      $region66: #{basic_block_forward.4} parent=59 // pred_check_branch
        %825 = sbr.rel (%p823) target = $region68
      $region67: #{basic_block_forward.4} parent=59 // pred_region
        %p826 = scmp.lt.s32.totalorder %s22, 1
        %s827 = scalar_select %p826, %s22, 1
        %s828 = scalar_lea.vmem %s8, %s827
      $region68: #{basic_block_forward.4} parent=59 // pred_fallthru
        _
    $region60: #{basic_block_forward.4} parent=5 // pred_fallthru
      _
  $region6: #{basic_block_forward.4} parent=0 // loop_footer
    %s20 = sadd.s32 1, %s16
  $region7: #{basic_block_forward.4} parent=0 // loop_footer_branch
    %15 = sbr.rel target = $region3
  $region8: #{basic_block_forward.4} parent=0 // loop_exit
    _

// kernel: basic_block_forward.5
$region0: #{basic_block_forward.5}
  #allocation0 [shape = 'u32[]', space=smem, size = 0x4, offset = 0x4, fixed_abs, tag = 'smem constant byte address 0x4 - core index']
  #allocation1 [shape = 'u32[144,128]{1,0:T(1,128)}', space=vmem, size = 0x12000, scoped, tag = 'internal scratch']
  #allocation2 [shape = 'bf16[144,256]{1,0:T(16,128)(2,1)}', space=vmem, size = 0x12000, scoped, tag = 'scratch operand']
  #allocation3 [shape = 'f32[1,1]{1,0:T(1,128)S(6)}', space=smem, size = 0x200, scoped, tag = 'scoped memory for basic_block_forward.5']
  %s0 = inlined_call_operand.<no memory space> [shape: f32[1,1], index: 0, kind: input, shape index: {}]
  %s1 = inlined_call_operand.vmem [shape: f32[2,16,256], index: 1, kind: input, shape index: {}]
  %s2 = inlined_call_operand.vmem [shape: bf16[16,144], index: 2, kind: input, shape index: {}]
  %s3 = inlined_call_operand.vmem [shape: f32[16,1], index: 3, kind: input, shape index: {}]
  %s4 = inlined_call_operand.vmem [shape: f32[16,1], index: 4, kind: input, shape index: {}]
  %s5 = inlined_call_operand.vmem [shape: f32[16,1], index: 5, kind: input, shape index: {}]
  %s6 = inlined_call_operand.vmem [shape: f32[9,256], index: 6, kind: input, shape index: {}]
  %s7 = inlined_call_operand.vmem [shape: f32[2,16,256], index: 7, kind: output, shape index: {0}]
  %s8 = inlined_call_operand.hbm [shape: f32[2,1,128], index: 8, kind: output, shape index: {1}]
  %9 = xla_tuple %s7, %s8
  %s10 = sld [smem:[#allocation0]]
  $region69: #{basic_block_forward.5} parent=0
    _
  %s12 = ssub.s32 1, %s10
  %s13 = scalar_select 0, %s12, %s10
  %14 = sst [smem:[#allocation3]] %s0
  $region1: #{basic_block_forward.5} parent=0
    #allocation4 [shape = 'u8[1024]{0}', space=vmem, size = 0x400, scoped, tag = 'output window, operand 1']
    #allocation5 [shape = 's32[2]{0}', space=sflag, size = 0x8, scoped, tag = 'scoped memory for basic_block_forward.5']
    %15 = vsyncpa [#allocation5], 0
    %s16 = scalar_lea.sflag [#allocation5], 1
    %17 = vsyncpa %s16, 0
    loop: start=0, step=1, limit=4
    $region2: #{basic_block_forward.5} parent=1 // loop_pre_header
      _
    $region3: #{basic_block_forward.5} parent=1 // loop_header
      %s19 = sphi 0, %s23
      %p20 = scmp.ge.s32.totalorder %s19, 4
      %s27 = sphi 0, %s27
      %s29 = sphi 0, %s27
      %s30 = sphi 0, %s29
      %s44 = sphi 0, %s30
      %s50 = sphi 0, %s52
      %s53 = sphi 0, %s50
      %s54 = sphi 0, %s53
      %s70 = sphi 0, %s54
      %s74 = sphi 0, %s74
      %s76 = sphi 0, %s74
      %s77 = sphi 0, %s76
      %s91 = sphi 0, %s77
      %s95 = sphi 0, %s95
      %s97 = sphi 0, %s95
      %s98 = sphi 0, %s97
      %s112 = sphi 0, %s98
      %s116 = sphi 0, %s116
      %s118 = sphi 0, %s116
      %s119 = sphi 0, %s118
      %s133 = sphi 0, %s119
      %s137 = sphi 0, %s137
      %s139 = sphi 0, %s137
      %s140 = sphi 0, %s139
      %s154 = sphi 0, %s140
      %s158 = sphi 0, %s158
      %s160 = sphi 0, %s158
      %s161 = sphi 0, %s160
      %s175 = sphi 0, %s161
      %s181 = sphi 0, %s183
      %s184 = sphi 0, %s181
      %s185 = sphi 0, %s184
      %s201 = sphi 0, %s185
      %s207 = sphi 0, %s209
      %s210 = sphi 0, %s207
      %s211 = sphi 0, %s210
      %s227 = sphi 0, %s211
    $region4: #{basic_block_forward.5} parent=1 // loop_header_branch
      %22 = sbr.rel (%p20) target = $region8
    $region5: #{basic_block_forward.5} parent=1 // loop_body
      %s24 = ssub.s32 %s19, 1
      %s25 = ssub.s32 %s19, 2
      %s26 = sadd.s32 %s19, 1
      %s28 = sadd.s32 %s27, 1
      %p31 = scmp.eq.s32.totalorder %s19, 1
      %p32 = scmp.ne.s32.totalorder %s27, %s29
      %p33 = scmp.eq.s32.totalorder %s19, 0
      %p34 = por %p32, %p33
      %p35 = scmp.ne.s32.totalorder %s27, %s29
      %p36 = scmp.eq.s32.totalorder %s24, 1
      %p37 = por %p35, %p36
      %p38 = scmp.ne.s32.totalorder %s29, %s30
      %p39 = scmp.eq.s32.totalorder %s24, 0
      %p40 = por %p38, %p39
      %p41 = scmp.ne.s32.totalorder %s29, %s30
      %p42 = scmp.eq.s32.totalorder %s25, 1
      %p43 = por %p41, %p42
      %p45 = scmp.ne.s32.totalorder %s30, %s44
      %p46 = scmp.eq.s32.totalorder %s25, 0
      %p47 = por %p45, %p46
      %s48 = ssub.s32 %s19, %s26
      %p49 = scmp.eq.s32.totalorder %s48, 0
      %s51 = sadd.s32 %s50, 1
      %s52 = scalar_select %p49, %s50, %s51
      %p55 = pneg %p49
      %p56 = scmp.eq.s32.totalorder %s19, 1
      %p57 = por %p55, %p56
      %p58 = scmp.ne.s32.totalorder %s50, %s53
      %p59 = scmp.eq.s32.totalorder %s19, 0
      %p60 = por %p58, %p59
      %p61 = scmp.ne.s32.totalorder %s50, %s53
      %p62 = scmp.eq.s32.totalorder %s24, 1
      %p63 = por %p61, %p62
      %p64 = scmp.ne.s32.totalorder %s53, %s54
      %p65 = scmp.eq.s32.totalorder %s24, 0
      %p66 = por %p64, %p65
      %p67 = scmp.ne.s32.totalorder %s53, %s54
      %p68 = scmp.eq.s32.totalorder %s25, 1
      %p69 = por %p67, %p68
      %p71 = scmp.ne.s32.totalorder %s54, %s70
      %p72 = scmp.eq.s32.totalorder %s25, 0
      %p73 = por %p71, %p72
      %s75 = sadd.s32 %s74, 1
      %p78 = scmp.eq.s32.totalorder %s19, 1
      %p79 = scmp.ne.s32.totalorder %s74, %s76
      %p80 = scmp.eq.s32.totalorder %s19, 0
      %p81 = por %p79, %p80
      %p82 = scmp.ne.s32.totalorder %s74, %s76
      %p83 = scmp.eq.s32.totalorder %s24, 1
      %p84 = por %p82, %p83
      %p85 = scmp.ne.s32.totalorder %s76, %s77
      %p86 = scmp.eq.s32.totalorder %s24, 0
      %p87 = por %p85, %p86
      %p88 = scmp.ne.s32.totalorder %s76, %s77
      %p89 = scmp.eq.s32.totalorder %s25, 1
      %p90 = por %p88, %p89
      %p92 = scmp.ne.s32.totalorder %s77, %s91
      %p93 = scmp.eq.s32.totalorder %s25, 0
      %p94 = por %p92, %p93
      %s96 = sadd.s32 %s95, 1
      %p99 = scmp.eq.s32.totalorder %s19, 1
      %p100 = scmp.ne.s32.totalorder %s95, %s97
      %p101 = scmp.eq.s32.totalorder %s19, 0
      %p102 = por %p100, %p101
      %p103 = scmp.ne.s32.totalorder %s95, %s97
      %p104 = scmp.eq.s32.totalorder %s24, 1
      %p105 = por %p103, %p104
      %p106 = scmp.ne.s32.totalorder %s97, %s98
      %p107 = scmp.eq.s32.totalorder %s24, 0
      %p108 = por %p106, %p107
      %p109 = scmp.ne.s32.totalorder %s97, %s98
      %p110 = scmp.eq.s32.totalorder %s25, 1
      %p111 = por %p109, %p110
      %p113 = scmp.ne.s32.totalorder %s98, %s112
      %p114 = scmp.eq.s32.totalorder %s25, 0
      %p115 = por %p113, %p114
      %s117 = sadd.s32 %s116, 1
      %p120 = scmp.eq.s32.totalorder %s19, 1
      %p121 = scmp.ne.s32.totalorder %s116, %s118
      %p122 = scmp.eq.s32.totalorder %s19, 0
      %p123 = por %p121, %p122
      %p124 = scmp.ne.s32.totalorder %s116, %s118
      %p125 = scmp.eq.s32.totalorder %s24, 1
      %p126 = por %p124, %p125
      %p127 = scmp.ne.s32.totalorder %s118, %s119
      %p128 = scmp.eq.s32.totalorder %s24, 0
      %p129 = por %p127, %p128
      %p130 = scmp.ne.s32.totalorder %s118, %s119
      %p131 = scmp.eq.s32.totalorder %s25, 1
      %p132 = por %p130, %p131
      %p134 = scmp.ne.s32.totalorder %s119, %s133
      %p135 = scmp.eq.s32.totalorder %s25, 0
      %p136 = por %p134, %p135
      %s138 = sadd.s32 %s137, 1
      %p141 = scmp.eq.s32.totalorder %s19, 1
      %p142 = scmp.ne.s32.totalorder %s137, %s139
      %p143 = scmp.eq.s32.totalorder %s19, 0
      %p144 = por %p142, %p143
      %p145 = scmp.ne.s32.totalorder %s137, %s139
      %p146 = scmp.eq.s32.totalorder %s24, 1
      %p147 = por %p145, %p146
      %p148 = scmp.ne.s32.totalorder %s139, %s140
      %p149 = scmp.eq.s32.totalorder %s24, 0
      %p150 = por %p148, %p149
      %p151 = scmp.ne.s32.totalorder %s139, %s140
      %p152 = scmp.eq.s32.totalorder %s25, 1
      %p153 = por %p151, %p152
      %p155 = scmp.ne.s32.totalorder %s140, %s154
      %p156 = scmp.eq.s32.totalorder %s25, 0
      %p157 = por %p155, %p156
      %s159 = sadd.s32 %s158, 1
      %p162 = scmp.eq.s32.totalorder %s19, 1
      %p163 = scmp.ne.s32.totalorder %s158, %s160
      %p164 = scmp.eq.s32.totalorder %s19, 0
      %p165 = por %p163, %p164
      %p166 = scmp.ne.s32.totalorder %s158, %s160
      %p167 = scmp.eq.s32.totalorder %s24, 1
      %p168 = por %p166, %p167
      %p169 = scmp.ne.s32.totalorder %s160, %s161
      %p170 = scmp.eq.s32.totalorder %s24, 0
      %p171 = por %p169, %p170
      %p172 = scmp.ne.s32.totalorder %s160, %s161
      %p173 = scmp.eq.s32.totalorder %s25, 1
      %p174 = por %p172, %p173
      %p176 = scmp.ne.s32.totalorder %s161, %s175
      %p177 = scmp.eq.s32.totalorder %s25, 0
      %p178 = por %p176, %p177
      %s179 = ssub.s32 %s19, %s26
      %p180 = scmp.eq.s32.totalorder %s179, 0
      %s182 = sadd.s32 %s181, 1
      %s183 = scalar_select %p180, %s181, %s182
      %p186 = pneg %p180
      %p187 = scmp.eq.s32.totalorder %s19, 1
      %p188 = por %p186, %p187
      %p189 = scmp.ne.s32.totalorder %s181, %s184
      %p190 = scmp.eq.s32.totalorder %s19, 0
      %p191 = por %p189, %p190
      %p192 = scmp.ne.s32.totalorder %s181, %s184
      %p193 = scmp.eq.s32.totalorder %s24, 1
      %p194 = por %p192, %p193
      %p195 = scmp.ne.s32.totalorder %s184, %s185
      %p196 = scmp.eq.s32.totalorder %s24, 0
      %p197 = por %p195, %p196
      %p198 = scmp.ne.s32.totalorder %s184, %s185
      %p199 = scmp.eq.s32.totalorder %s25, 1
      %p200 = por %p198, %p199
      %p202 = scmp.ne.s32.totalorder %s185, %s201
      %p203 = scmp.eq.s32.totalorder %s25, 0
      %p204 = por %p202, %p203
      %s205 = ssub.s32 %s19, %s26
      %p206 = scmp.eq.s32.totalorder %s205, 0
      %s208 = sadd.s32 %s207, 1
      %s209 = scalar_select %p206, %s207, %s208
      %p212 = pneg %p206
      %p213 = scmp.eq.s32.totalorder %s19, 1
      %p214 = por %p212, %p213
      %p215 = scmp.ne.s32.totalorder %s207, %s210
      %p216 = scmp.eq.s32.totalorder %s19, 0
      %p217 = por %p215, %p216
      %p218 = scmp.ne.s32.totalorder %s207, %s210
      %p219 = scmp.eq.s32.totalorder %s24, 1
      %p220 = por %p218, %p219
      %p221 = scmp.ne.s32.totalorder %s210, %s211
      %p222 = scmp.eq.s32.totalorder %s24, 0
      %p223 = por %p221, %p222
      %p224 = scmp.ne.s32.totalorder %s210, %s211
      %p225 = scmp.eq.s32.totalorder %s25, 1
      %p226 = por %p224, %p225
      %p228 = scmp.ne.s32.totalorder %s211, %s227
      %p229 = scmp.eq.s32.totalorder %s25, 0
      %p230 = por %p228, %p229
      %p231 = scmp.le.s32.totalorder 1, %s19
      %p232 = scmp.lt.s32.totalorder %s19, 3
      %p233 = pnand %p231, %p232
      %p234 = pneg %p233
      // Predicated region
      $region9: #{basic_block_forward.5} parent=5 // pred_check
        _
      $region10: #{basic_block_forward.5} parent=5 // pred_check_branch
        %236 = sbr.rel (%p233) target = $region12
      $region11: #{basic_block_forward.5} parent=5 // pred_region
        %s237 = ssub.s32 %s19, 1
        // Predicated region
        $region13: #{basic_block_forward.5} parent=11 // pred_check
          %p238 = pneg %p40
        $region14: #{basic_block_forward.5} parent=11 // pred_check_branch
          %240 = sbr.rel (%p238) target = $region16
        $region15: #{basic_block_forward.5} parent=11 // pred_region
          _
        $region16: #{basic_block_forward.5} parent=11 // pred_fallthru
          _
        // Predicated region
        $region17: #{basic_block_forward.5} parent=11 // pred_check
          %p241 = pneg %p87
        $region18: #{basic_block_forward.5} parent=11 // pred_check_branch
          %243 = sbr.rel (%p241) target = $region20
        $region19: #{basic_block_forward.5} parent=11 // pred_region
          _
        $region20: #{basic_block_forward.5} parent=11 // pred_fallthru
          _
        // Predicated region
        $region21: #{basic_block_forward.5} parent=11 // pred_check
          %p244 = pneg %p108
        $region22: #{basic_block_forward.5} parent=11 // pred_check_branch
          %246 = sbr.rel (%p244) target = $region24
        $region23: #{basic_block_forward.5} parent=11 // pred_region
          _
        $region24: #{basic_block_forward.5} parent=11 // pred_fallthru
          _
        // Predicated region
        $region25: #{basic_block_forward.5} parent=11 // pred_check
          %p247 = pneg %p129
        $region26: #{basic_block_forward.5} parent=11 // pred_check_branch
          %249 = sbr.rel (%p247) target = $region28
        $region27: #{basic_block_forward.5} parent=11 // pred_region
          _
        $region28: #{basic_block_forward.5} parent=11 // pred_fallthru
          _
        // Predicated region
        $region29: #{basic_block_forward.5} parent=11 // pred_check
          %p250 = pneg %p150
        $region30: #{basic_block_forward.5} parent=11 // pred_check_branch
          %252 = sbr.rel (%p250) target = $region32
        $region31: #{basic_block_forward.5} parent=11 // pred_region
          _
        $region32: #{basic_block_forward.5} parent=11 // pred_fallthru
          _
        // Predicated region
        $region33: #{basic_block_forward.5} parent=11 // pred_check
          %p253 = pneg %p171
        $region34: #{basic_block_forward.5} parent=11 // pred_check_branch
          %255 = sbr.rel (%p253) target = $region36
        $region35: #{basic_block_forward.5} parent=11 // pred_region
          _
        $region36: #{basic_block_forward.5} parent=11 // pred_fallthru
          _
      $region12: #{basic_block_forward.5} parent=5 // pred_fallthru
        _
      %p256 = scmp.lt.s32.totalorder %s19, 2
      // Predicated region
      $region37: #{basic_block_forward.5} parent=5 // pred_check
        %p257 = pneg %p256
      $region38: #{basic_block_forward.5} parent=5 // pred_check_branch
        %259 = sbr.rel (%p257) target = $region40
      $region39: #{basic_block_forward.5} parent=5 // pred_region
        // Predicated region
        $region41: #{basic_block_forward.5} parent=39 // pred_check
          %p260 = pneg %p60
        $region42: #{basic_block_forward.5} parent=39 // pred_check_branch
          %262 = sbr.rel (%p260) target = $region44
        $region43: #{basic_block_forward.5} parent=39 // pred_region
          %p263 = scmp.lt.s32.totalorder %s19, 1
          %s264 = scalar_select %p263, %s19, 1
          %s265 = smul.addr %s264, 4
          %s266 = smul.addr %s265, 8
          %s267 = scalar_lea.vmem %s1, %s266
        $region44: #{basic_block_forward.5} parent=39 // pred_fallthru
          _
      $region40: #{basic_block_forward.5} parent=5 // pred_fallthru
        _
      %p268 = scmp.le.s32.totalorder 1, %s19
      %p269 = scmp.lt.s32.totalorder %s19, 3
      %p270 = pnand %p268, %p269
      %p271 = pneg %p270
      // Predicated region
      $region45: #{basic_block_forward.5} parent=5 // pred_check
        _
      $region46: #{basic_block_forward.5} parent=5 // pred_check_branch
        %273 = sbr.rel (%p270) target = $region48
      $region47: #{basic_block_forward.5} parent=5 // pred_region
        %s274 = ssub.s32 %s19, 1
        %p275 = pneg %p40
        %p276 = pneg %p37
        %p277 = scmp.lt.s32.totalorder %s24, 1
        %s278 = scalar_select %p277, %s24, 1
        %s279 = smul.addr %s278, 4
        %s280 = smul.addr %s279, 8
        %s281 = scalar_lea.vmem %s1, %s280
        %p282 = pneg %p66
        %p283 = pneg %p63
        %p284 = pneg %p87
        %p285 = pneg %p84
        %p286 = pneg %p108
        %p287 = pneg %p105
        %p288 = pneg %p129
        %p289 = pneg %p126
        %p290 = pneg %p150
        %p291 = pneg %p147
        %p292 = pneg %p171
        %p293 = pneg %p168
        %p294 = pneg %p197
        %p295 = pneg %p194
        %p296 = scmp.lt.s32.totalorder %s24, 1
        %s297 = scalar_select %p296, %s24, 1
        %s298 = smul.addr %s297, 4
        %s299 = smul.addr %s298, 8
        %s300 = scalar_lea.vmem %s7, %s299
        %p301 = pneg %p223
        %p302 = pneg %p220
        %s303 = sand.u32 %s210, 1
        %s304 = scalar_lea.sflag [#allocation5], %s303
        %s305 = sand.u32 %s210, 1
        %s306 = scalar_lea.vmem [#allocation4], %s305
        %p307 = scmp.lt.s32.totalorder %s24, 1
        %s308 = scalar_select %p307, %s24, 1
        %s309 = smul.addr %s308, 4
        %s310 = smul.addr %s309, 8
        %s311 = scalar_lea.vmem %s1, %s310
        %p312 = scmp.lt.s32.totalorder %s24, 1
        %s313 = scalar_select %p312, %s24, 1
        %s314 = smul.addr %s313, 4
        %s315 = smul.addr %s314, 8
        %s316 = scalar_lea.vmem %s7, %s315
        %s318 = sld [smem:[#allocation3]]
        %v319 = vstv %s318
        %v320 = vrcp.pop %v319
        %s321 = vtos %v320
        %s322 = smul.f32 7.0, %s321
        %v323 = vld [vmem:[%s311] sm:$0xff]
        %v324 = vld [vmem:[%s311 + $0x8] sm:$0xff]
        %v325 = vld [vmem:[%s311 + $0x10] sm:$0xff]
        %v326 = vld [vmem:[%s311 + $0x18] sm:$0xff]
        %s327 = ssub.f32 0.0, %s318
        %v328 = vstv %s327
        %v329 = vmax.f32 %v328, %v323
        %v330 = vmax.f32 %v328, %v324
        %v331 = vmax.f32 %v328, %v325
        %v332 = vmax.f32 %v328, %v326
        %v333 = vstv %s318
        %v334 = vmin.f32 %v333, %v329
        %v335 = vmin.f32 %v333, %v330
        %v336 = vmin.f32 %v333, %v331
        %v337 = vmin.f32 %v333, %v332
        %v338 = vstv %s322
        %v339 = vmul.f32 %v334, %v338
        %v340 = vmul.f32 %v335, %v338
        %v341 = vmul.f32 %v336, %v338
        %v342 = vmul.f32 %v337, %v338
        %v343 = vround.ne.pseudo %v339
        %v344 = vround.ne.pseudo %v340
        %v345 = vround.ne.pseudo %v341
        %v346 = vround.ne.pseudo %v342
        %347 = vrot.lane.b32.xlu0 %v343, 17
        %v348 = vpop.permute.xlu0 %347
        %349 = vrot.lane.b32.xlu0 %v345, 17
        %v350 = vpop.permute.xlu0 %349
        %351 = vrot.lane.b32.xlu0 %v344, 17
        %v352 = vpop.permute.xlu0 %351
        %353 = vrot.lane.b32.xlu0 %v346, 17
        %v354 = vpop.permute.xlu0 %353
        %v355 = vlaneseq
        %v356 = vand.u32 %v355, 127
        %vm357 = vcmp.lt.s32.totalorder %v356, 17
        %v358 = vsel %vm357, %v348, %v352
        %v359 = vsel %vm357, %v350, %v354
        %v360 = vsel %vm357, %v352, %v348
        %v361 = vsel %vm357, %v354, %v350
        %v362 = vld [vmem:[%s6] ss:$8 sm:$0x3]
        %v364 = vlaneseq
        %v365 = vshrl.u32 %v364, 7
        %v366 = vsub.s32 0, %v365
        %v367 = vrot.slane %v362, %v366
        %v368 = vlaneseq
        %v369 = vshrl.u32 %v368, 7
        %v370 = vsub.s32 1, %v369
        %v371 = vrot.slane %v362, %v370
        %v374 = vmul.f32 %v360, %v367
        %v375 = vmul.f32 %v358, %v371
        %v376 = vmul.f32 %v361, %v367
        %v377 = vmul.f32 %v359, %v371
        %v378 = vpack.c.bf16 %v376, %v374
        %v379 = vpack.c.bf16 %v377, %v375
        %380 = vst [vmem:[#allocation2] sm:$0xff] %v378
        %381 = vst [vmem:[#allocation2 + $0x8] sm:$0xff] %v379
        %382 = vrot.lane.b32.xlu0 %v343, 16
        %v383 = vpop.permute.xlu0 %382
        %384 = vrot.lane.b32.xlu0 %v345, 16
        %v385 = vpop.permute.xlu0 %384
        %386 = vrot.lane.b32.xlu0 %v344, 16
        %v387 = vpop.permute.xlu0 %386
        %388 = vrot.lane.b32.xlu0 %v346, 16
        %v389 = vpop.permute.xlu0 %388
        %vm390 = vcmp.lt.s32.totalorder %v356, 16
        %v391 = vsel %vm390, %v383, %v387
        %v392 = vsel %vm390, %v385, %v389
        %v393 = vsel %vm390, %v387, %v383
        %v394 = vsel %vm390, %v389, %v385
        %s395 = scalar_lea.vmem %s6, 1
        %v396 = vld [vmem:[%s395] ss:$8 sm:$0x3]
        %v398 = vlaneseq
        %v399 = vshrl.u32 %v398, 7
        %v400 = vsub.s32 0, %v399
        %v401 = vrot.slane %v396, %v400
        %v402 = vlaneseq
        %v403 = vshrl.u32 %v402, 7
        %v404 = vsub.s32 1, %v403
        %v405 = vrot.slane %v396, %v404
        %v408 = vmul.f32 %v393, %v401
        %v409 = vmul.f32 %v391, %v405
        %v410 = vmul.f32 %v394, %v401
        %v411 = vmul.f32 %v392, %v405
        %v412 = vpack.c.bf16 %v410, %v408
        %v413 = vpack.c.bf16 %v411, %v409
        %414 = vst [vmem:[#allocation2 + $0x10] sm:$0xff] %v412
        %415 = vst [vmem:[#allocation2 + $0x18] sm:$0xff] %v413
        %416 = vrot.lane.b32.xlu0 %v343, 15
        %v417 = vpop.permute.xlu0 %416
        %418 = vrot.lane.b32.xlu0 %v345, 15
        %v419 = vpop.permute.xlu0 %418
        %420 = vrot.lane.b32.xlu0 %v344, 15
        %v421 = vpop.permute.xlu0 %420
        %422 = vrot.lane.b32.xlu0 %v346, 15
        %v423 = vpop.permute.xlu0 %422
        %vm424 = vcmp.lt.s32.totalorder %v356, 15
        %v425 = vsel %vm424, %v417, %v421
        %v426 = vsel %vm424, %v419, %v423
        %v427 = vsel %vm424, %v421, %v417
        %v428 = vsel %vm424, %v423, %v419
        %s429 = scalar_lea.vmem %s6, 2
        %v430 = vld [vmem:[%s429] ss:$8 sm:$0x3]
        %v432 = vlaneseq
        %v433 = vshrl.u32 %v432, 7
        %v434 = vsub.s32 0, %v433
        %v435 = vrot.slane %v430, %v434
        %v436 = vlaneseq
        %v437 = vshrl.u32 %v436, 7
        %v438 = vsub.s32 1, %v437
        %v439 = vrot.slane %v430, %v438
        %v442 = vmul.f32 %v427, %v435
        %v443 = vmul.f32 %v425, %v439
        %v444 = vmul.f32 %v428, %v435
        %v445 = vmul.f32 %v426, %v439
        %v446 = vpack.c.bf16 %v444, %v442
        %v447 = vpack.c.bf16 %v445, %v443
        %448 = vst [vmem:[#allocation2 + $0x20] sm:$0xff] %v446
        %449 = vst [vmem:[#allocation2 + $0x28] sm:$0xff] %v447
        %450 = vrot.lane.b32.xlu0 %v343, 1
        %v451 = vpop.permute.xlu0 %450
        %452 = vrot.lane.b32.xlu0 %v345, 1
        %v453 = vpop.permute.xlu0 %452
        %454 = vrot.lane.b32.xlu0 %v344, 1
        %v455 = vpop.permute.xlu0 %454
        %456 = vrot.lane.b32.xlu0 %v346, 1
        %v457 = vpop.permute.xlu0 %456
        %vm458 = vcmp.lt.s32.totalorder %v356, 1
        %v459 = vsel %vm458, %v451, %v455
        %v460 = vsel %vm458, %v453, %v457
        %v461 = vsel %vm458, %v455, %v451
        %v462 = vsel %vm458, %v457, %v453
        %s463 = scalar_lea.vmem %s6, 3
        %v464 = vld [vmem:[%s463] ss:$8 sm:$0x3]
        %v466 = vlaneseq
        %v467 = vshrl.u32 %v466, 7
        %v468 = vsub.s32 0, %v467
        %v469 = vrot.slane %v464, %v468
        %v470 = vlaneseq
        %v471 = vshrl.u32 %v470, 7
        %v472 = vsub.s32 1, %v471
        %v473 = vrot.slane %v464, %v472
        %v476 = vmul.f32 %v461, %v469
        %v477 = vmul.f32 %v459, %v473
        %v478 = vmul.f32 %v462, %v469
        %v479 = vmul.f32 %v460, %v473
        %v480 = vpack.c.bf16 %v478, %v476
        %v481 = vpack.c.bf16 %v479, %v477
        %482 = vst [vmem:[#allocation2 + $0x30] sm:$0xff] %v480
        %483 = vst [vmem:[#allocation2 + $0x38] sm:$0xff] %v481
        %v484 = vpack.c.bf16 %v345, %v343
        %v485 = vpack.c.bf16 %v346, %v344
        %486 = vst [vmem:[#allocation2 + $0x40] sm:$0xff] %v484
        %487 = vst [vmem:[#allocation2 + $0x48] sm:$0xff] %v485
        %488 = vrot.lane.b32.xlu0 %v343, 127
        %v489 = vpop.permute.xlu0 %488
        %490 = vrot.lane.b32.xlu0 %v345, 127
        %v491 = vpop.permute.xlu0 %490
        %492 = vrot.lane.b32.xlu0 %v344, 127
        %v493 = vpop.permute.xlu0 %492
        %494 = vrot.lane.b32.xlu0 %v346, 127
        %v495 = vpop.permute.xlu0 %494
        %vm496 = vcmp.lt.s32.totalorder %v356, 127
        %v497 = vsel %vm496, %v489, %v493
        %v498 = vsel %vm496, %v491, %v495
        %v499 = vsel %vm496, %v493, %v489
        %v500 = vsel %vm496, %v495, %v491
        %s501 = scalar_lea.vmem %s6, 5
        %v502 = vld [vmem:[%s501] ss:$8 sm:$0x3]
        %v504 = vlaneseq
        %v505 = vshrl.u32 %v504, 7
        %v506 = vsub.s32 0, %v505
        %v507 = vrot.slane %v502, %v506
        %v508 = vlaneseq
        %v509 = vshrl.u32 %v508, 7
        %v510 = vsub.s32 1, %v509
        %v511 = vrot.slane %v502, %v510
        %v514 = vmul.f32 %v497, %v507
        %v515 = vmul.f32 %v499, %v511
        %v516 = vmul.f32 %v498, %v507
        %v517 = vmul.f32 %v500, %v511
        %v518 = vpack.c.bf16 %v516, %v514
        %v519 = vpack.c.bf16 %v517, %v515
        %520 = vst [vmem:[#allocation2 + $0x50] sm:$0xff] %v518
        %521 = vst [vmem:[#allocation2 + $0x58] sm:$0xff] %v519
        %522 = vrot.lane.b32.xlu0 %v343, 113
        %v523 = vpop.permute.xlu0 %522
        %524 = vrot.lane.b32.xlu0 %v345, 113
        %v525 = vpop.permute.xlu0 %524
        %526 = vrot.lane.b32.xlu0 %v344, 113
        %v527 = vpop.permute.xlu0 %526
        %528 = vrot.lane.b32.xlu0 %v346, 113
        %v529 = vpop.permute.xlu0 %528
        %vm530 = vcmp.lt.s32.totalorder %v356, 113
        %v531 = vsel %vm530, %v523, %v527
        %v532 = vsel %vm530, %v525, %v529
        %v533 = vsel %vm530, %v527, %v523
        %v534 = vsel %vm530, %v529, %v525
        %s535 = scalar_lea.vmem %s6, 6
        %v536 = vld [vmem:[%s535] ss:$8 sm:$0x3]
        %v538 = vlaneseq
        %v539 = vshrl.u32 %v538, 7
        %v540 = vsub.s32 0, %v539
        %v541 = vrot.slane %v536, %v540
        %v542 = vlaneseq
        %v543 = vshrl.u32 %v542, 7
        %v544 = vsub.s32 1, %v543
        %v545 = vrot.slane %v536, %v544
        %v548 = vmul.f32 %v531, %v541
        %v549 = vmul.f32 %v533, %v545
        %v550 = vmul.f32 %v532, %v541
        %v551 = vmul.f32 %v534, %v545
        %v552 = vpack.c.bf16 %v550, %v548
        %v553 = vpack.c.bf16 %v551, %v549
        %554 = vst [vmem:[#allocation2 + $0x60] sm:$0xff] %v552
        %555 = vst [vmem:[#allocation2 + $0x68] sm:$0xff] %v553
        %556 = vrot.lane.b32.xlu0 %v343, 112
        %v557 = vpop.permute.xlu0 %556
        %558 = vrot.lane.b32.xlu0 %v345, 112
        %v559 = vpop.permute.xlu0 %558
        %560 = vrot.lane.b32.xlu0 %v344, 112
        %v561 = vpop.permute.xlu0 %560
        %562 = vrot.lane.b32.xlu0 %v346, 112
        %v563 = vpop.permute.xlu0 %562
        %vm564 = vcmp.lt.s32.totalorder %v356, 112
        %v565 = vsel %vm564, %v557, %v561
        %v566 = vsel %vm564, %v559, %v563
        %v567 = vsel %vm564, %v561, %v557
        %v568 = vsel %vm564, %v563, %v559
        %s569 = scalar_lea.vmem %s6, 7
        %v570 = vld [vmem:[%s569] ss:$8 sm:$0x3]
        %v572 = vlaneseq
        %v573 = vshrl.u32 %v572, 7
        %v574 = vsub.s32 0, %v573
        %v575 = vrot.slane %v570, %v574
        %v576 = vlaneseq
        %v577 = vshrl.u32 %v576, 7
        %v578 = vsub.s32 1, %v577
        %v579 = vrot.slane %v570, %v578
        %v582 = vmul.f32 %v565, %v575
        %v583 = vmul.f32 %v567, %v579
        %v584 = vmul.f32 %v566, %v575
        %v585 = vmul.f32 %v568, %v579
        %v586 = vpack.c.bf16 %v584, %v582
        %v587 = vpack.c.bf16 %v585, %v583
        %588 = vst [vmem:[#allocation2 + $0x70] sm:$0xff] %v586
        %589 = vst [vmem:[#allocation2 + $0x78] sm:$0xff] %v587
        %590 = vrot.lane.b32.xlu0 %v343, 111
        %v591 = vpop.permute.xlu0 %590
        %592 = vrot.lane.b32.xlu0 %v345, 111
        %v593 = vpop.permute.xlu0 %592
        %594 = vrot.lane.b32.xlu0 %v344, 111
        %v595 = vpop.permute.xlu0 %594
        %596 = vrot.lane.b32.xlu0 %v346, 111
        %v597 = vpop.permute.xlu0 %596
        %vm598 = vcmp.lt.s32.totalorder %v356, 111
        %v599 = vsel %vm598, %v591, %v595
        %v600 = vsel %vm598, %v593, %v597
        %v601 = vsel %vm598, %v595, %v591
        %v602 = vsel %vm598, %v597, %v593
        %s603 = scalar_lea.vmem %s6, 16
        %v604 = vld [vmem:[%s603] ss:$8 sm:$0x3]
        %v606 = vlaneseq
        %v607 = vshrl.u32 %v606, 7
        %v608 = vsub.s32 0, %v607
        %v609 = vrot.slane %v604, %v608
        %v610 = vlaneseq
        %v611 = vshrl.u32 %v610, 7
        %v612 = vsub.s32 1, %v611
        %v613 = vrot.slane %v604, %v612
        %v616 = vmul.f32 %v599, %v609
        %v617 = vmul.f32 %v601, %v613
        %v618 = vmul.f32 %v600, %v609
        %v619 = vmul.f32 %v602, %v613
        %v620 = vpack.c.bf16 %v618, %v616
        %v621 = vpack.c.bf16 %v619, %v617
        %622 = vst [vmem:[#allocation2 + $0x80] sm:$0xff] %v620
        %623 = vst [vmem:[#allocation2 + $0x88] sm:$0xff] %v621
        %v624 = vld [vmem:[%s2] sm:$0xff]
        %v625 = vld [vmem:[%s2 + $0x8] sm:$0xff]
        %v626 = vld [vmem:[#allocation2] sm:$0xff]
        %v627 = vld [vmem:[#allocation2 + $0x8] sm:$0xff]
        %v628 = vld [vmem:[#allocation2 + $0x10] sm:$0xff]
        %v629 = vld [vmem:[#allocation2 + $0x18] sm:$0xff]
        %v630 = vld [vmem:[#allocation2 + $0x20] sm:$0xff]
        %v631 = vld [vmem:[#allocation2 + $0x28] sm:$0xff]
        %v632 = vld [vmem:[#allocation2 + $0x30] sm:$0xff]
        %v633 = vld [vmem:[#allocation2 + $0x38] sm:$0xff]
        %v634 = vld [vmem:[#allocation2 + $0x40] sm:$0xff]
        %v635 = vld [vmem:[#allocation2 + $0x48] sm:$0xff]
        %v636 = vld [vmem:[#allocation2 + $0x50] sm:$0xff]
        %v637 = vld [vmem:[#allocation2 + $0x58] sm:$0xff]
        %v638 = vld [vmem:[#allocation2 + $0x60] sm:$0xff]
        %v639 = vld [vmem:[#allocation2 + $0x68] sm:$0xff]
        %v640 = vld [vmem:[#allocation2 + $0x70] sm:$0xff]
        %v641 = vld [vmem:[#allocation2 + $0x78] sm:$0xff]
        %v642 = vld [vmem:[#allocation2 + $0x80] sm:$0xff]
        %v643 = vld [vmem:[#allocation2 + $0x88] sm:$0xff]
        %v646 = vunpack.c.l.b16 %v624
        %v647 = vunpack.c.h.b16 %v624
        %v648 = vunpack.c.l.b16 %v625
        %v649 = vunpack.c.h.b16 %v625
        %v650 = vpack.c.b16 %v648, %v646
        %v651 = vpack.c.b16 %v649, %v647
        %vm653 = vcmask 130048
        %v655 = vsel %vm653, %v651, 0
        %657 = vmatprep.subr.bf16.mxu0 %v627
        %658 = vmatpush1.bf16.msra.mxu0 %v626
        %659 = vmatprep.subr.bf16.mxu0 %v629
        %660 = vmatpush1.bf16.msra.mxu0 %v628
        %661 = vmatprep.subr.bf16.mxu0 %v631
        %662 = vmatpush1.bf16.msra.mxu0 %v630
        %663 = vmatprep.subr.bf16.mxu0 %v633
        %664 = vmatpush1.bf16.msra.mxu0 %v632
        %665 = vmatprep.subr.bf16.mxu0 %v635
        %666 = vmatpush1.bf16.msra.mxu0 %v634
        %667 = vmatprep.subr.bf16.mxu0 %v637
        %668 = vmatpush1.bf16.msra.mxu0 %v636
        %669 = vmatprep.subr.bf16.mxu0 %v639
        %670 = vmatpush1.bf16.msra.mxu0 %v638
        %671 = vmatprep.subr.bf16.mxu0 %v641
        %672 = vmatpush1.bf16.msra.mxu0 %v640
        %673 = vmatprep.subr.bf16.mxu0 %v643
        %674 = vmatpush1.bf16.msra.mxu0 %v642
        %675 = vmatprep.subr.bf16.mxu0 0
        %676 = vmatpush1.bf16.msra.mxu0 0
        %677 = vmatprep.subr.bf16.mxu0 0
        %678 = vmatpush1.bf16.msra.mxu0 0
        %679 = vmatprep.subr.bf16.mxu0 0
        %680 = vmatpush1.bf16.msra.mxu0 0
        %681 = vmatprep.subr.bf16.mxu0 0
        %682 = vmatpush1.bf16.msra.mxu0 0
        %683 = vmatprep.subr.bf16.mxu0 0
        %684 = vmatpush1.bf16.msra.mxu0 0
        %685 = vmatprep.subr.bf16.mxu0 0
        %686 = vmatpush1.bf16.msra.mxu0 0
        %687 = vmatprep.subr.bf16.mxu0 0
        %688 = vmatpush1.bf16.msra.mxu0 0
        %689 = vmatprep.mubr.bf16.mxu0 %v655
        %690 = vmatmul.mubr.bf16.gmra.mrb[0].mxu0 %v650
        %v691 = vpop.f32.mrb[0].mxu0
        %v692 = vadd.f32 0.0, %v691
        %v693 = vpop.f32.mrb[0].mxu0
        %v694 = vadd.f32 0.0, %v693
        %v695 = vpop.f32.mrb[0].mxu0
        %v696 = vadd.f32 0.0, %v695
        %v697 = vpop.f32.mrb[0].mxu0
        %v698 = vadd.f32 0.0, %v697
        %699 = vdwg.mxu0
        %v700 = vld [vmem:[#allocation2 + $0x40] sm:$0xff]
        %v701 = vld [vmem:[#allocation2 + $0x48] sm:$0xff]
        %v702 = vunpack.c.l.bf16 %v700
        %v703 = vunpack.c.l.bf16 %v701
        %v704 = vunpack.c.h.bf16 %v700
        %v705 = vunpack.c.h.bf16 %v701
        %v706 = vld [vmem:[%s3] sm:$0xff]
        %v707 = vld [vmem:[%s3 + $0x8] sm:$0xff]
        %709 = vset.pattern.permute.xlu0 0
        %710 = vperm.xlu0 %709, %v706
        %v711 = vpop.permute.xlu0 %710
        %714 = vset.pattern.permute.xlu0 0
        %715 = vperm.xlu0 %714, %v707
        %v716 = vpop.permute.xlu0 %715
        %v718 = vmul.f32 %v692, %v711
        %v719 = vmul.f32 %v694, %v711
        %v720 = vmul.f32 %v696, %v716
        %v721 = vmul.f32 %v698, %v716
        %v722 = vround.ne.pseudo %v718
        %v723 = vround.ne.pseudo %v719
        %v724 = vround.ne.pseudo %v720
        %v725 = vround.ne.pseudo %v721
        %v726 = vld [vmem:[%s4] sm:$0xff]
        %v727 = vld [vmem:[%s4 + $0x8] sm:$0xff]
        %729 = vset.pattern.permute.xlu0 0
        %730 = vperm.xlu0 %729, %v726
        %v731 = vpop.permute.xlu0 %730
        %734 = vset.pattern.permute.xlu0 0
        %735 = vperm.xlu0 %734, %v727
        %v736 = vpop.permute.xlu0 %735
        %v738 = vmul.f32 %v722, %v731
        %v739 = vmul.f32 %v723, %v731
        %v740 = vmul.f32 %v724, %v736
        %v741 = vmul.f32 %v725, %v736
        %v742 = vld [vmem:[%s5] sm:$0xff]
        %v743 = vld [vmem:[%s5 + $0x8] sm:$0xff]
        %745 = vset.pattern.permute.xlu0 0
        %746 = vperm.xlu0 %745, %v742
        %v747 = vpop.permute.xlu0 %746
        %750 = vset.pattern.permute.xlu0 0
        %751 = vperm.xlu0 %750, %v743
        %v752 = vpop.permute.xlu0 %751
        %v754 = vadd.f32 %v738, %v747
        %v755 = vadd.f32 %v739, %v747
        %v756 = vadd.f32 %v740, %v752
        %v757 = vadd.f32 %v741, %v752
        %v758 = vmul.f32 %v702, 0.14285715
        %v759 = vmul.f32 %v703, 0.14285715
        %v760 = vmul.f32 %v704, 0.14285715
        %v761 = vmul.f32 %v705, 0.14285715
        %v762 = vadd.f32 %v754, %v758
        %v763 = vadd.f32 %v755, %v759
        %v764 = vadd.f32 %v756, %v760
        %v765 = vadd.f32 %v757, %v761
        %v766 = vmax.f32 %v762, -1.0
        %v767 = vmax.f32 %v763, -1.0
        %v768 = vmax.f32 %v764, -1.0
        %v769 = vmax.f32 %v765, -1.0
        %v770 = vmin.f32 %v766, 1.0
        %v771 = vmin.f32 %v767, 1.0
        %v772 = vmin.f32 %v768, 1.0
        %v773 = vmin.f32 %v769, 1.0
        %774 = vst [vmem:[%s316] sm:$0xff] %v770
        %775 = vst [vmem:[%s316 + $0x8] sm:$0xff] %v771
        %776 = vst [vmem:[%s316 + $0x10] sm:$0xff] %v772
        %777 = vst [vmem:[%s316 + $0x18] sm:$0xff] %v773
        %v778 = vand.u32 2147483647, %v770
        %v779 = vand.u32 2147483647, %v771
        %v780 = vand.u32 2147483647, %v772
        %v781 = vand.u32 2147483647, %v773
        %v782 = vmax.f32 %v778, %v779
        %v783 = vmax.f32 %v780, %v781
        %v784 = vmax.f32 %v782, %v783
        %785 = vmax.xlane.f32.xlu0 %v784
        %v786 = vpop.xlane.xlu0 %785
        %v787 = vrot.slane %v786, 4
        %v788 = vmax.f32 %v786, %v787
        %v789 = vrot.slane %v788, 2
        %v790 = vmax.f32 %v788, %v789
        %v791 = vrot.slane %v790, 1
        %v792 = vmax.f32 %v790, %v791
        %s793 = vtos %v792
        %v794 = vstv %s793
        %v795 = vadd.f32 %v794, 0.0
        %796 = vst [vmem:[%s306] sm:$0x1] %v795
        %p797 = scmp.lt.s32.totalorder %s24, 1
        %s798 = scalar_select %p797, %s24, 1
        %s799 = smul.addr %s798, 4
        %s800 = smul.addr %s799, 8
        %s801 = scalar_lea.vmem %s7, %s800
        %s802 = sand.u32 %s210, 1
        %s803 = scalar_lea.sflag [#allocation5], %s802
        %s804 = sand.u32 %s210, 1
        %s805 = scalar_lea.vmem [#allocation4], %s804
        // Predicated region
        $region49: #{basic_block_forward.5} parent=47 // pred_check
          %p806 = pneg %p194
        $region50: #{basic_block_forward.5} parent=47 // pred_check_branch
          %808 = sbr.rel (%p806) target = $region52
        $region51: #{basic_block_forward.5} parent=47 // pred_region
          _
        $region52: #{basic_block_forward.5} parent=47 // pred_fallthru
          _
        // Predicated region
        $region53: #{basic_block_forward.5} parent=47 // pred_check
          %p809 = pneg %p220
        $region54: #{basic_block_forward.5} parent=47 // pred_check_branch
          %811 = sbr.rel (%p809) target = $region56
        $region55: #{basic_block_forward.5} parent=47 // pred_region
          %s813 = ssub.s32 16, 16
          %814 = vsyncadd %s803, %s813
          %s815 = smul.addr %s24, 16
          %s816 = scalar_lea.hbm %s8, %s815
          %s818 = sshll.u32 %s805, 4
          %s819 = int_to_ptr.vmem [resolvable:$true] %s818
          %821 = dma.vmem_to_hbm [thread:$0]  %s819, 16, %s816, %s803
        $region56: #{basic_block_forward.5} parent=47 // pred_fallthru
          _
      $region48: #{basic_block_forward.5} parent=5 // pred_fallthru
        _
      %p822 = scmp.le.s32.totalorder 2, %s19
      // Predicated region
      $region57: #{basic_block_forward.5} parent=5 // pred_check
        %p823 = pneg %p822
      $region58: #{basic_block_forward.5} parent=5 // pred_check_branch
        %825 = sbr.rel (%p823) target = $region60
      $region59: #{basic_block_forward.5} parent=5 // pred_region
        %s826 = ssub.s32 %s19, 2
        // Predicated region
        $region61: #{basic_block_forward.5} parent=59 // pred_check
          %p827 = pneg %p200
        $region62: #{basic_block_forward.5} parent=59 // pred_check_branch
          %829 = sbr.rel (%p827) target = $region64
        $region63: #{basic_block_forward.5} parent=59 // pred_region
          %p830 = scmp.lt.s32.totalorder %s25, 1
          %s831 = scalar_select %p830, %s25, 1
          %s832 = smul.addr %s831, 4
          %s833 = smul.addr %s832, 8
          %s834 = scalar_lea.vmem %s7, %s833
        $region64: #{basic_block_forward.5} parent=59 // pred_fallthru
          _
        // Predicated region
        $region65: #{basic_block_forward.5} parent=59 // pred_check
          %p835 = pneg %p226
        $region66: #{basic_block_forward.5} parent=59 // pred_check_branch
          %837 = sbr.rel (%p835) target = $region68
        $region67: #{basic_block_forward.5} parent=59 // pred_region
          %s838 = sand.u32 %s211, 1
          %s839 = scalar_lea.sflag [#allocation5], %s838
          %s840 = sand.u32 %s211, 1
          %s841 = scalar_lea.vmem [#allocation4], %s840
          %842 = dma.done %s839, 16
        $region68: #{basic_block_forward.5} parent=59 // pred_fallthru
          _
      $region60: #{basic_block_forward.5} parent=5 // pred_fallthru
        _
    $region6: #{basic_block_forward.5} parent=1 // loop_footer
      %s23 = sadd.s32 1, %s19
    $region7: #{basic_block_forward.5} parent=1 // loop_footer_branch
      %18 = sbr.rel target = $region3
    $region8: #{basic_block_forward.5} parent=1 // loop_exit
      _
    %843 = vsyncpa [#allocation5], 1
    %s844 = scalar_lea.sflag [#allocation5], 1
    %845 = vsyncpa %s844, 1

</llo_original>
